<compile_context>
chip_gen: v7x
topology: tpu7x:2x2x1
jax: 0.10.0
libtpu: 0.0.40
codegen_flags: <defaults>
</compile_context>

<pallas_src>
import functools
import math

import jax
import jax.numpy as jnp
from jax.experimental import pallas as pl
from jax.experimental.pallas import tpu as pltpu


def _dilation_schedule(num_layers):
    return tuple(2 ** i if i + 1 < num_layers else 1 for i in range(num_layers))


def _round_up(x, m):
    return -(-x // m) * m


def _pick_batch_tile(B, L, target_rows=256):
    # Bt must divide B and satisfy the sublane tiling rule for the (Bt, L)
    # output block (Bt == B or Bt % 8 == 0).  Prefer the smallest tile that
    # fills the MXU M-dim (>= target_rows) so several grid steps remain for
    # the two v7x TensorCores.
    for bt in range(8, B, 8):
        if B % bt == 0 and bt * L >= target_rows:
            return bt
    return B


# ----------------------------- Fused kernel -------------------------------- #

def _idcnn_fused_kernel(x_ref, sl_ref, w0_ref, b0_ref, wblk_ref, bblk_ref,
                        wfc_ref, bfc_ref,                 # inputs (VMEM)
                        pred_ref,                         # output (VMEM)
                        buf_a, buf_b,                     # VMEM scratch
                        *, Bt, L, E, F, K, dilations, repeats, num_cls,
                        max_pad):
    """Bt batch elements: full IDCNN stack, activations resident in VMEM.

    buf_a/buf_b: (Bt, L + 2*max_pad, max(E, F)) f32 ping-pong slabs.  The
    valid region is rows [max_pad, max_pad + L) of each element; the halo rows
    stay zero so every dilated tap reads zero padding for free.  max_pad is a
    multiple of 8, so every valid-region store/load is sublane-aligned.
    """
    Cmax = buf_a.shape[-1]

    # Zero only the halo rows -- they are never overwritten, and the valid
    # rows are fully rewritten by every layer.
    halo = jnp.zeros((Bt, max_pad, Cmax), buf_a.dtype)
    for buf in (buf_a, buf_b):
        buf[:, pl.ds(0, max_pad), :] = halo
        buf[:, pl.ds(max_pad + L, max_pad), :] = halo

    # Load the embedded input into the valid region of slab A.
    buf_a[:, pl.ds(max_pad, L), :E] = x_ref[...].astype(buf_a.dtype)

    bufs = (buf_a, buf_b)

    def conv_layer(src, dst, get_w, bias, cin, cout, dil, relu):
        # K accumulated MXU dots (one per dilated tap).  Operands are bf16,
        # accumulation f32 (preferred_element_type); bias/ReLU tail in f32.
        pad_l = (K // 2) * dil
        acc = None
        for j in range(K):
            tap = src[:, pl.ds(max_pad - pad_l + j * dil, L), :cin]
            tap = tap.reshape(Bt * L, cin).astype(jnp.bfloat16)
            d = jnp.dot(tap, get_w(j), preferred_element_type=jnp.float32)
            acc = d if acc is None else acc + d
        acc = acc + bias                                   # (1, cout) f32
        if relu:
            acc = jnp.maximum(acc, 0.0)
        dst[:, pl.ds(max_pad, L), :cout] = acc.reshape(Bt, L, cout)

    # conv0 (E -> F, dil=1) + ReLU
    conv_layer(bufs[0], bufs[1], lambda j: w0_ref[j], b0_ref[...],
               E, F, 1, True)
    cur = 1

    # Dilated block, repeated `repeats` times (weights shared across repeats).
    for _ in range(repeats):
        for li, dil in enumerate(dilations):
            conv_layer(bufs[cur], bufs[1 - cur],
                       lambda j, li=li: wblk_ref[li, j],
                       bblk_ref[li], F, F, dil, True)
            cur = 1 - cur

    # out_fc (kernel size 1), hoisted out of the repeats loop (only the last
    # repeat's scores are consumed at inference).
    h = bufs[cur][:, pl.ds(max_pad, L), :F].reshape(Bt * L, F)
    scores = jnp.dot(h.astype(jnp.bfloat16), wfc_ref[...],
                     preferred_element_type=jnp.float32)
    scores = scores + bfc_ref[...]                         # (Bt*L, C) f32

    # Fused argmax over the class axis (first-max-index, like torch.max).
    col = jax.lax.broadcasted_iota(jnp.int32, (Bt * L, num_cls), 1)
    mx = jnp.max(scores, axis=-1, keepdims=True)
    pred = jnp.min(jnp.where(scores == mx, col, num_cls),
                   axis=-1, keepdims=True)                 # (Bt*L, 1) int32
    pred = pred.reshape(Bt, L)

    # Fused seq_len mask: positions >= seq_len -> 0.  Lane-dense (Bt, L) store.
    pos = jax.lax.broadcasted_iota(jnp.int32, (Bt, L), 1)
    pred_ref[...] = jnp.where(pos < sl_ref[...], pred, 0)


# --------------------------- Parameter creation ---------------------------- #

def _xavier_normal_conv(key, k, cin, cout):
    # nn.init.xavier_normal_ on a Conv1d weight (cout, cin, k):
    # fan_in = cin*k, fan_out = cout*k, std = sqrt(2/(fan_in+fan_out)).
    std = math.sqrt(2.0 / (cin * k + cout * k))
    return jax.random.normal(key, (k, cin, cout), jnp.float32) * std


def make_params(key, *, vocab, embed_dim, num_filters, kernel_size,
                num_layers, num_cls):
    keys = jax.random.split(key, 5 + 2 * num_layers)
    params = {}
    params["embed"] = jax.random.normal(
        keys[0], (vocab, embed_dim), jnp.float32) * 0.1
    params["conv0_w"] = _xavier_normal_conv(
        keys[1], kernel_size, embed_dim, num_filters)
    params["conv0_b"] = jax.random.normal(keys[2], (num_filters,), jnp.float32) * 0.01
    blk_w, blk_b = [], []
    for li in range(num_layers):
        blk_w.append(_xavier_normal_conv(
            keys[3 + 2 * li], kernel_size, num_filters, num_filters))
        blk_b.append(jax.random.normal(
            keys[4 + 2 * li], (num_filters,), jnp.float32) * 0.01)
    params["block_w"] = jnp.stack(blk_w)      # (num_layers, K, F, F)
    params["block_b"] = jnp.stack(blk_b)      # (num_layers, F)
    params["fc_w"] = _xavier_normal_conv(
        keys[3 + 2 * num_layers], 1, num_filters, num_cls)
    params["fc_b"] = jax.random.normal(
        keys[4 + 2 * num_layers], (num_cls,), jnp.float32) * 0.01
    return params


# ------------------------------ Forward pass ------------------------------- #

def idcnn_forward(params, words, seq_len, *, repeats, batch_tile=None):
    """words: (B, L) int32, seq_len: (B,) int32 -> pred (B, L) int32."""
    B, L = words.shape
    E = params["embed"].shape[1]
    K = params["conv0_w"].shape[0]
    F = params["conv0_w"].shape[2]
    num_layers = params["block_w"].shape[0]
    num_cls = params["fc_w"].shape[2]
    dilations = _dilation_schedule(num_layers)

    # Halo rounded up to a sublane tile (>= 8 rows) -> aligned stores/loads.
    raw_pad = (K // 2) * max((1,) + dilations)
    max_pad = max(8, _round_up(raw_pad, 8))
    Cmax = max(E, F)
    Lp = L + 2 * max_pad

    Bt = batch_tile if batch_tile is not None else _pick_batch_tile(B, L)
    assert B % Bt == 0 and (Bt == B or Bt % 8 == 0)

    # Embedding lookup (plain JAX gather glue).
    x = jnp.take(params["embed"], words, axis=0)                  # (B, L, E)

    # bf16 matmul operands; biases stay f32 for the f32 tail in-kernel.
    w0 = params["conv0_w"].astype(jnp.bfloat16)                   # (K, E, F)
    wblk = params["block_w"].astype(jnp.bfloat16)                 # (nl, K, F, F)
    wfc = params["fc_w"].reshape(F, num_cls).astype(jnp.bfloat16)
    b0 = params["conv0_b"].reshape(1, F)
    bblk = params["block_b"].reshape(num_layers, 1, F)
    bfc = params["fc_b"].reshape(1, num_cls)
    sl = seq_len.astype(jnp.int32).reshape(B, 1)

    kernel = functools.partial(
        _idcnn_fused_kernel, Bt=Bt, L=L, E=E, F=F, K=K, dilations=dilations,
        repeats=repeats, num_cls=num_cls, max_pad=max_pad)

    pred = pl.pallas_call(
        kernel,
        out_shape=jax.ShapeDtypeStruct((B, L), jnp.int32),
        grid_spec=pltpu.PrefetchScalarGridSpec(
            num_scalar_prefetch=0,
            grid=(B // Bt,),
            in_specs=[
                pl.BlockSpec((Bt, L, E), lambda i: (i, 0, 0)),           # x
                pl.BlockSpec((Bt, 1), lambda i: (i, 0)),                 # seq_len
                pl.BlockSpec((K, E, F), lambda i: (0, 0, 0)),            # w0
                pl.BlockSpec((1, F), lambda i: (0, 0)),                  # b0
                pl.BlockSpec((num_layers, K, F, F),
                             lambda i: (0, 0, 0, 0)),                    # wblk
                pl.BlockSpec((num_layers, 1, F), lambda i: (0, 0, 0)),   # bblk
                pl.BlockSpec((F, num_cls), lambda i: (0, 0)),            # wfc
                pl.BlockSpec((1, num_cls), lambda i: (0, 0)),            # bfc
            ],
            out_specs=pl.BlockSpec((Bt, L), lambda i: (i, 0)),
            scratch_shapes=[pltpu.VMEM((Bt, Lp, Cmax), jnp.float32),
                            pltpu.VMEM((Bt, Lp, Cmax), jnp.float32)],
        ),
        compiler_params=pltpu.CompilerParams(
            dimension_semantics=("parallel",)),   # both TCs get work on v7x
    )(x, sl, w0, b0, wblk, bblk, wfc, bfc)

    return pred                                                   # (B, L)


# -------------------------- Pure-JAX reference ------------------------------ #

def _reference_scores(params, words, *, repeats):
    x = jnp.take(params["embed"], words, axis=0)

    def conv(h, w, b, dil, relu):
        Kk = w.shape[0]
        pad = (Kk // 2) * dil
        hp = jnp.pad(h, ((0, 0), (pad, pad), (0, 0)))
        Lx = h.shape[1]
        out = b[None, None, :]
        for j in range(Kk):
            out = out + jnp.einsum("blc,cd->bld",
                                   hp[:, j * dil:j * dil + Lx, :], w[j])
        return jnp.maximum(out, 0.0) if relu else out

    num_layers = params["block_w"].shape[0]
    dils = _dilation_schedule(num_layers)
    h = conv(x, params["conv0_w"], params["conv0_b"], 1, True)
    for _ in range(repeats):
        for li, d in enumerate(dils):
            h = conv(h, params["block_w"][li], params["block_b"][li], d, True)
    return conv(h, params["fc_w"], params["fc_b"], 1, False)      # (B, L, C)


# ---------------------------------- Main ----------------------------------- #

if __name__ == "__main__":
    B, L = 2, 16
    VOCAB = 50
    EMBED_DIM = 32
    NUM_FILTERS = 32
    KERNEL_SIZE = 3
    NUM_LAYERS = 3
    REPEATS = 2
    NUM_CLS = 8

    root = jax.random.PRNGKey(0)
    k_param, k_words = jax.random.split(root, 2)

    params = make_params(
        k_param, vocab=VOCAB, embed_dim=EMBED_DIM, num_filters=NUM_FILTERS,
        kernel_size=KERNEL_SIZE, num_layers=NUM_LAYERS, num_cls=NUM_CLS)

    words = jax.random.randint(k_words, (B, L), 0, VOCAB, dtype=jnp.int32)
    seq_len = jnp.array([L, L - 6], dtype=jnp.int32)

    pred = idcnn_forward(params, words, seq_len, repeats=REPEATS)
    jax.block_until_ready(pred)
    assert pred.shape == (B, L) and pred.dtype == jnp.int32

    # Correctness check vs pure-JAX f32 reference.  The kernel uses bf16 MXU
    # operands (f32 accumulation), so near-ties may flip: require that the
    # class the kernel picked scores within tol of the reference max; masked
    # positions must be exactly 0.
    ref_scores = _reference_scores(params, words, repeats=REPEATS)
    mask = jnp.arange(L)[None, :] < seq_len[:, None]
    picked = jnp.take_along_axis(ref_scores, pred[..., None], axis=-1)[..., 0]
    top = ref_scores.max(axis=-1)
    tol = 2e-2 * (jnp.abs(top) + 1.0)
    ok = jnp.where(mask, picked >= top - tol, pred == 0)
    assert bool(jnp.all(ok))
    assert bool(jnp.all((pred >= 0) & (pred < NUM_CLS)))

    # TODO(synk): CRF decode / loss paths (use_crf, block_loss, target), char
    # embeddings and the optional projection head are not exercised by this
    # inference forward.
    print("KERNEL_OK")
</pallas_src>

<mosaic_0001>
module attributes {stable_mosaic.version = 11 : i64} {
  func.func @_idcnn_fused_kernel(%arg0: i32, %arg1: memref<2x16x32xf32, #tpu.memory_space<vmem>>, %arg2: memref<2x1xi32, #tpu.memory_space<vmem>>, %arg3: memref<3x32x32xbf16, #tpu.memory_space<vmem>>, %arg4: memref<1x32xf32, #tpu.memory_space<vmem>>, %arg5: memref<3x3x32x32xbf16, #tpu.memory_space<vmem>>, %arg6: memref<3x1x32xf32, #tpu.memory_space<vmem>>, %arg7: memref<32x8xbf16, #tpu.memory_space<vmem>>, %arg8: memref<1x8xf32, #tpu.memory_space<vmem>>, %arg9: memref<2x16xi32, #tpu.memory_space<vmem>>, %arg10: memref<2x32x32xf32, #tpu.memory_space<vmem>>, %arg11: memref<2x32x32xf32, #tpu.memory_space<vmem>>) attributes {dimension_semantics = [#tpu.dimension_semantics<parallel>], iteration_bounds = array<i64: 1>, scalar_prefetch = 0 : i64, scratch_operands = 2 : i64, tpu.core_type = #tpu.core_type<tc>, window_params = [{transform_indices = @transform_0, window_bounds = array<i64: 2, 16, 32>}, {transform_indices = @transform_1, window_bounds = array<i64: 2, 1>}, {pipeline_mode = #tpu.pipeline_mode<synchronous>, transform_indices = @transform_2, window_bounds = array<i64: 3, 32, 32>}, {pipeline_mode = #tpu.pipeline_mode<synchronous>, transform_indices = @transform_3, window_bounds = array<i64: 1, 32>}, {pipeline_mode = #tpu.pipeline_mode<synchronous>, transform_indices = @transform_4, window_bounds = array<i64: 3, 3, 32, 32>}, {pipeline_mode = #tpu.pipeline_mode<synchronous>, transform_indices = @transform_5, window_bounds = array<i64: 3, 1, 32>}, {pipeline_mode = #tpu.pipeline_mode<synchronous>, transform_indices = @transform_6, window_bounds = array<i64: 32, 8>}, {pipeline_mode = #tpu.pipeline_mode<synchronous>, transform_indices = @transform_7, window_bounds = array<i64: 1, 8>}, {transform_indices = @transform_8, window_bounds = array<i64: 2, 16>}]} {
    %cst = arith.constant 0.000000e+00 : f32
    %0 = vector.broadcast %cst : f32 to vector<2x8x32xf32>
    %c0 = arith.constant 0 : index
    %c0_0 = arith.constant 0 : index
    %c0_1 = arith.constant 0 : index
    %1 = vector.load %arg10[%c0, %c0_0, %c0_1] : memref<2x32x32xf32, #tpu.memory_space<vmem>>, vector<2x8x32xf32>
    tpu.vector_store %arg10[%c0, %c0_0, %c0_1], %0 {strides = array<i32>} : memref<2x32x32xf32, #tpu.memory_space<vmem>>, vector<2x8x32xf32>,
    %c0_2 = arith.constant 0 : index
    %c24 = arith.constant 24 : index
    %c0_3 = arith.constant 0 : index
    %2 = vector.load %arg10[%c0_2, %c24, %c0_3] : memref<2x32x32xf32, #tpu.memory_space<vmem>>, vector<2x8x32xf32>
    tpu.vector_store %arg10[%c0_2, %c24, %c0_3], %0 {strides = array<i32>} : memref<2x32x32xf32, #tpu.memory_space<vmem>>, vector<2x8x32xf32>,
    %c0_4 = arith.constant 0 : index
    %c0_5 = arith.constant 0 : index
    %c0_6 = arith.constant 0 : index
    %3 = vector.load %arg11[%c0_4, %c0_5, %c0_6] : memref<2x32x32xf32, #tpu.memory_space<vmem>>, vector<2x8x32xf32>
    tpu.vector_store %arg11[%c0_4, %c0_5, %c0_6], %0 {strides = array<i32>} : memref<2x32x32xf32, #tpu.memory_space<vmem>>, vector<2x8x32xf32>,
    %c0_7 = arith.constant 0 : index
    %c24_8 = arith.constant 24 : index
    %c0_9 = arith.constant 0 : index
    %4 = vector.load %arg11[%c0_7, %c24_8, %c0_9] : memref<2x32x32xf32, #tpu.memory_space<vmem>>, vector<2x8x32xf32>
    tpu.vector_store %arg11[%c0_7, %c24_8, %c0_9], %0 {strides = array<i32>} : memref<2x32x32xf32, #tpu.memory_space<vmem>>, vector<2x8x32xf32>,
    %c0_10 = arith.constant 0 : index
    %c0_11 = arith.constant 0 : index
    %c0_12 = arith.constant 0 : index
    %5 = vector.load %arg1[%c0_10, %c0_11, %c0_12] : memref<2x16x32xf32, #tpu.memory_space<vmem>>, vector<2x16x32xf32>
    %c0_13 = arith.constant 0 : index
    %c8 = arith.constant 8 : index
    %c0_14 = arith.constant 0 : index
    %6 = vector.load %arg10[%c0_13, %c8, %c0_14] : memref<2x32x32xf32, #tpu.memory_space<vmem>>, vector<2x16x32xf32>
    tpu.vector_store %arg10[%c0_13, %c8, %c0_14], %5 {strides = array<i32>} : memref<2x32x32xf32, #tpu.memory_space<vmem>>, vector<2x16x32xf32>,
    %c0_15 = arith.constant 0 : index
    %c0_16 = arith.constant 0 : index
    %7 = vector.load %arg4[%c0_15, %c0_16] : memref<1x32xf32, #tpu.memory_space<vmem>>, vector<1x32xf32>
    %c0_17 = arith.constant 0 : index
    %c7 = arith.constant 7 : index
    %c0_18 = arith.constant 0 : index
    %8 = vector.load %arg10[%c0_17, %c7, %c0_18] : memref<2x32x32xf32, #tpu.memory_space<vmem>>, vector<2x16x32xf32>
    %9 = vector.shape_cast %8 : vector<2x16x32xf32> to vector<32x32xf32>
    %10 = arith.truncf %9 : vector<32x32xf32> to vector<32x32xbf16>
    %c0_19 = arith.constant 0 : index
    %c0_20 = arith.constant 0 : index
    %c0_21 = arith.constant 0 : index
    %11 = vector.load %arg3[%c0_19, %c0_20, %c0_21] : memref<3x32x32xbf16, #tpu.memory_space<vmem>>, vector<1x32x32xbf16>
    %12 = vector.shape_cast %11 : vector<1x32x32xbf16> to vector<32x32xbf16>
    %cst_22 = arith.constant dense<0.000000e+00> : vector<32x32xf32>
    %13 = tpu.matmul %10, %12, %cst_22 {dimension_numbers = #tpu.dot_dimension_numbers<[1], [0], [0], [1], [0, 0, 1, 1], [], []>} : vector<32x32xbf16>, vector<32x32xbf16>, vector<32x32xf32> -> vector<32x32xf32>
    %c0_23 = arith.constant 0 : index
    %c8_24 = arith.constant 8 : index
    %c0_25 = arith.constant 0 : index
    %14 = vector.load %arg10[%c0_23, %c8_24, %c0_25] : memref<2x32x32xf32, #tpu.memory_space<vmem>>, vector<2x16x32xf32>
    %15 = vector.shape_cast %14 : vector<2x16x32xf32> to vector<32x32xf32>
    %16 = arith.truncf %15 : vector<32x32xf32> to vector<32x32xbf16>
    %c1 = arith.constant 1 : index
    %c0_26 = arith.constant 0 : index
    %c0_27 = arith.constant 0 : index
    %17 = vector.load %arg3[%c1, %c0_26, %c0_27] : memref<3x32x32xbf16, #tpu.memory_space<vmem>>, vector<1x32x32xbf16>
    %18 = vector.shape_cast %17 : vector<1x32x32xbf16> to vector<32x32xbf16>
    %cst_28 = arith.constant dense<0.000000e+00> : vector<32x32xf32>
    %19 = tpu.matmul %16, %18, %cst_28 {dimension_numbers = #tpu.dot_dimension_numbers<[1], [0], [0], [1], [0, 0, 1, 1], [], []>} : vector<32x32xbf16>, vector<32x32xbf16>, vector<32x32xf32> -> vector<32x32xf32>
    %20 = arith.addf %13, %19 : vector<32x32xf32>
    %c0_29 = arith.constant 0 : index
    %c9 = arith.constant 9 : index
    %c0_30 = arith.constant 0 : index
    %21 = vector.load %arg10[%c0_29, %c9, %c0_30] : memref<2x32x32xf32, #tpu.memory_space<vmem>>, vector<2x16x32xf32>
    %22 = vector.shape_cast %21 : vector<2x16x32xf32> to vector<32x32xf32>
    %23 = arith.truncf %22 : vector<32x32xf32> to vector<32x32xbf16>
    %c2 = arith.constant 2 : index
    %c0_31 = arith.constant 0 : index
    %c0_32 = arith.constant 0 : index
    %24 = vector.load %arg3[%c2, %c0_31, %c0_32] : memref<3x32x32xbf16, #tpu.memory_space<vmem>>, vector<1x32x32xbf16>
    %25 = vector.shape_cast %24 : vector<1x32x32xbf16> to vector<32x32xbf16>
    %cst_33 = arith.constant dense<0.000000e+00> : vector<32x32xf32>
    %26 = tpu.matmul %23, %25, %cst_33 {dimension_numbers = #tpu.dot_dimension_numbers<[1], [0], [0], [1], [0, 0, 1, 1], [], []>} : vector<32x32xbf16>, vector<32x32xbf16>, vector<32x32xf32> -> vector<32x32xf32>
    %27 = arith.addf %20, %26 : vector<32x32xf32>
    %28 = vector.broadcast %7 : vector<1x32xf32> to vector<32x32xf32>
    %29 = arith.addf %27, %28 : vector<32x32xf32>
    %cst_34 = arith.constant 0.000000e+00 : f32
    %30 = vector.broadcast %cst_34 : f32 to vector<32x32xf32>
    %31 = arith.maximumf %29, %30 : vector<32x32xf32>
    %32 = vector.shape_cast %31 : vector<32x32xf32> to vector<2x16x32xf32>
    %c0_35 = arith.constant 0 : index
    %c8_36 = arith.constant 8 : index
    %c0_37 = arith.constant 0 : index
    %33 = vector.load %arg11[%c0_35, %c8_36, %c0_37] : memref<2x32x32xf32, #tpu.memory_space<vmem>>, vector<2x16x32xf32>
    tpu.vector_store %arg11[%c0_35, %c8_36, %c0_37], %32 {strides = array<i32>} : memref<2x32x32xf32, #tpu.memory_space<vmem>>, vector<2x16x32xf32>,
    %c0_38 = arith.constant 0 : index
    %c0_39 = arith.constant 0 : index
    %c0_40 = arith.constant 0 : index
    %34 = vector.load %arg6[%c0_38, %c0_39, %c0_40] : memref<3x1x32xf32, #tpu.memory_space<vmem>>, vector<1x1x32xf32>
    %35 = vector.shape_cast %34 : vector<1x1x32xf32> to vector<1x32xf32>
    %c0_41 = arith.constant 0 : index
    %c7_42 = arith.constant 7 : index
    %c0_43 = arith.constant 0 : index
    %36 = vector.load %arg11[%c0_41, %c7_42, %c0_43] : memref<2x32x32xf32, #tpu.memory_space<vmem>>, vector<2x16x32xf32>
    %37 = vector.shape_cast %36 : vector<2x16x32xf32> to vector<32x32xf32>
    %38 = arith.truncf %37 : vector<32x32xf32> to vector<32x32xbf16>
    %c0_44 = arith.constant 0 : index
    %c0_45 = arith.constant 0 : index
    %c0_46 = arith.constant 0 : index
    %c0_47 = arith.constant 0 : index
    %39 = vector.load %arg5[%c0_44, %c0_45, %c0_46, %c0_47] : memref<3x3x32x32xbf16, #tpu.memory_space<vmem>>, vector<1x1x32x32xbf16>
    %40 = vector.shape_cast %39 : vector<1x1x32x32xbf16> to vector<32x32xbf16>
    %cst_48 = arith.constant dense<0.000000e+00> : vector<32x32xf32>
    %41 = tpu.matmul %38, %40, %cst_48 {dimension_numbers = #tpu.dot_dimension_numbers<[1], [0], [0], [1], [0, 0, 1, 1], [], []>} : vector<32x32xbf16>, vector<32x32xbf16>, vector<32x32xf32> -> vector<32x32xf32>
    %c0_49 = arith.constant 0 : index
    %c8_50 = arith.constant 8 : index
    %c0_51 = arith.constant 0 : index
    %42 = vector.load %arg11[%c0_49, %c8_50, %c0_51] : memref<2x32x32xf32, #tpu.memory_space<vmem>>, vector<2x16x32xf32>
    %43 = vector.shape_cast %42 : vector<2x16x32xf32> to vector<32x32xf32>
    %44 = arith.truncf %43 : vector<32x32xf32> to vector<32x32xbf16>
    %c0_52 = arith.constant 0 : index
    %c1_53 = arith.constant 1 : index
    %c0_54 = arith.constant 0 : index
    %c0_55 = arith.constant 0 : index
    %45 = vector.load %arg5[%c0_52, %c1_53, %c0_54, %c0_55] : memref<3x3x32x32xbf16, #tpu.memory_space<vmem>>, vector<1x1x32x32xbf16>
    %46 = vector.shape_cast %45 : vector<1x1x32x32xbf16> to vector<32x32xbf16>
    %cst_56 = arith.constant dense<0.000000e+00> : vector<32x32xf32>
    %47 = tpu.matmul %44, %46, %cst_56 {dimension_numbers = #tpu.dot_dimension_numbers<[1], [0], [0], [1], [0, 0, 1, 1], [], []>} : vector<32x32xbf16>, vector<32x32xbf16>, vector<32x32xf32> -> vector<32x32xf32>
    %48 = arith.addf %41, %47 : vector<32x32xf32>
    %c0_57 = arith.constant 0 : index
    %c9_58 = arith.constant 9 : index
    %c0_59 = arith.constant 0 : index
    %49 = vector.load %arg11[%c0_57, %c9_58, %c0_59] : memref<2x32x32xf32, #tpu.memory_space<vmem>>, vector<2x16x32xf32>
    %50 = vector.shape_cast %49 : vector<2x16x32xf32> to vector<32x32xf32>
    %51 = arith.truncf %50 : vector<32x32xf32> to vector<32x32xbf16>
    %c0_60 = arith.constant 0 : index
    %c2_61 = arith.constant 2 : index
    %c0_62 = arith.constant 0 : index
    %c0_63 = arith.constant 0 : index
    %52 = vector.load %arg5[%c0_60, %c2_61, %c0_62, %c0_63] : memref<3x3x32x32xbf16, #tpu.memory_space<vmem>>, vector<1x1x32x32xbf16>
    %53 = vector.shape_cast %52 : vector<1x1x32x32xbf16> to vector<32x32xbf16>
    %cst_64 = arith.constant dense<0.000000e+00> : vector<32x32xf32>
    %54 = tpu.matmul %51, %53, %cst_64 {dimension_numbers = #tpu.dot_dimension_numbers<[1], [0], [0], [1], [0, 0, 1, 1], [], []>} : vector<32x32xbf16>, vector<32x32xbf16>, vector<32x32xf32> -> vector<32x32xf32>
    %55 = arith.addf %48, %54 : vector<32x32xf32>
    %56 = vector.broadcast %35 : vector<1x32xf32> to vector<32x32xf32>
    %57 = arith.addf %55, %56 : vector<32x32xf32>
    %cst_65 = arith.constant 0.000000e+00 : f32
    %58 = vector.broadcast %cst_65 : f32 to vector<32x32xf32>
    %59 = arith.maximumf %57, %58 : vector<32x32xf32>
    %60 = vector.shape_cast %59 : vector<32x32xf32> to vector<2x16x32xf32>
    %c0_66 = arith.constant 0 : index
    %c8_67 = arith.constant 8 : index
    %c0_68 = arith.constant 0 : index
    %61 = vector.load %arg10[%c0_66, %c8_67, %c0_68] : memref<2x32x32xf32, #tpu.memory_space<vmem>>, vector<2x16x32xf32>
    tpu.vector_store %arg10[%c0_66, %c8_67, %c0_68], %60 {strides = array<i32>} : memref<2x32x32xf32, #tpu.memory_space<vmem>>, vector<2x16x32xf32>,
    %c1_69 = arith.constant 1 : index
    %c0_70 = arith.constant 0 : index
    %c0_71 = arith.constant 0 : index
    %62 = vector.load %arg6[%c1_69, %c0_70, %c0_71] : memref<3x1x32xf32, #tpu.memory_space<vmem>>, vector<1x1x32xf32>
    %63 = vector.shape_cast %62 : vector<1x1x32xf32> to vector<1x32xf32>
    %c0_72 = arith.constant 0 : index
    %c6 = arith.constant 6 : index
    %c0_73 = arith.constant 0 : index
    %64 = vector.load %arg10[%c0_72, %c6, %c0_73] : memref<2x32x32xf32, #tpu.memory_space<vmem>>, vector<2x16x32xf32>
    %65 = vector.shape_cast %64 : vector<2x16x32xf32> to vector<32x32xf32>
    %66 = arith.truncf %65 : vector<32x32xf32> to vector<32x32xbf16>
    %c1_74 = arith.constant 1 : index
    %c0_75 = arith.constant 0 : index
    %c0_76 = arith.constant 0 : index
    %c0_77 = arith.constant 0 : index
    %67 = vector.load %arg5[%c1_74, %c0_75, %c0_76, %c0_77] : memref<3x3x32x32xbf16, #tpu.memory_space<vmem>>, vector<1x1x32x32xbf16>
    %68 = vector.shape_cast %67 : vector<1x1x32x32xbf16> to vector<32x32xbf16>
    %cst_78 = arith.constant dense<0.000000e+00> : vector<32x32xf32>
    %69 = tpu.matmul %66, %68, %cst_78 {dimension_numbers = #tpu.dot_dimension_numbers<[1], [0], [0], [1], [0, 0, 1, 1], [], []>} : vector<32x32xbf16>, vector<32x32xbf16>, vector<32x32xf32> -> vector<32x32xf32>
    %c0_79 = arith.constant 0 : index
    %c8_80 = arith.constant 8 : index
    %c0_81 = arith.constant 0 : index
    %70 = vector.load %arg10[%c0_79, %c8_80, %c0_81] : memref<2x32x32xf32, #tpu.memory_space<vmem>>, vector<2x16x32xf32>
    %71 = vector.shape_cast %70 : vector<2x16x32xf32> to vector<32x32xf32>
    %72 = arith.truncf %71 : vector<32x32xf32> to vector<32x32xbf16>
    %c1_82 = arith.constant 1 : index
    %c1_83 = arith.constant 1 : index
    %c0_84 = arith.constant 0 : index
    %c0_85 = arith.constant 0 : index
    %73 = vector.load %arg5[%c1_82, %c1_83, %c0_84, %c0_85] : memref<3x3x32x32xbf16, #tpu.memory_space<vmem>>, vector<1x1x32x32xbf16>
    %74 = vector.shape_cast %73 : vector<1x1x32x32xbf16> to vector<32x32xbf16>
    %cst_86 = arith.constant dense<0.000000e+00> : vector<32x32xf32>
    %75 = tpu.matmul %72, %74, %cst_86 {dimension_numbers = #tpu.dot_dimension_numbers<[1], [0], [0], [1], [0, 0, 1, 1], [], []>} : vector<32x32xbf16>, vector<32x32xbf16>, vector<32x32xf32> -> vector<32x32xf32>
    %76 = arith.addf %69, %75 : vector<32x32xf32>
    %c0_87 = arith.constant 0 : index
    %c10 = arith.constant 10 : index
    %c0_88 = arith.constant 0 : index
    %77 = vector.load %arg10[%c0_87, %c10, %c0_88] : memref<2x32x32xf32, #tpu.memory_space<vmem>>, vector<2x16x32xf32>
    %78 = vector.shape_cast %77 : vector<2x16x32xf32> to vector<32x32xf32>
    %79 = arith.truncf %78 : vector<32x32xf32> to vector<32x32xbf16>
    %c1_89 = arith.constant 1 : index
    %c2_90 = arith.constant 2 : index
    %c0_91 = arith.constant 0 : index
    %c0_92 = arith.constant 0 : index
    %80 = vector.load %arg5[%c1_89, %c2_90, %c0_91, %c0_92] : memref<3x3x32x32xbf16, #tpu.memory_space<vmem>>, vector<1x1x32x32xbf16>
    %81 = vector.shape_cast %80 : vector<1x1x32x32xbf16> to vector<32x32xbf16>
    %cst_93 = arith.constant dense<0.000000e+00> : vector<32x32xf32>
    %82 = tpu.matmul %79, %81, %cst_93 {dimension_numbers = #tpu.dot_dimension_numbers<[1], [0], [0], [1], [0, 0, 1, 1], [], []>} : vector<32x32xbf16>, vector<32x32xbf16>, vector<32x32xf32> -> vector<32x32xf32>
    %83 = arith.addf %76, %82 : vector<32x32xf32>
    %84 = vector.broadcast %63 : vector<1x32xf32> to vector<32x32xf32>
    %85 = arith.addf %83, %84 : vector<32x32xf32>
    %cst_94 = arith.constant 0.000000e+00 : f32
    %86 = vector.broadcast %cst_94 : f32 to vector<32x32xf32>
    %87 = arith.maximumf %85, %86 : vector<32x32xf32>
    %88 = vector.shape_cast %87 : vector<32x32xf32> to vector<2x16x32xf32>
    %c0_95 = arith.constant 0 : index
    %c8_96 = arith.constant 8 : index
    %c0_97 = arith.constant 0 : index
    %89 = vector.load %arg11[%c0_95, %c8_96, %c0_97] : memref<2x32x32xf32, #tpu.memory_space<vmem>>, vector<2x16x32xf32>
    tpu.vector_store %arg11[%c0_95, %c8_96, %c0_97], %88 {strides = array<i32>} : memref<2x32x32xf32, #tpu.memory_space<vmem>>, vector<2x16x32xf32>,
    %c2_98 = arith.constant 2 : index
    %c0_99 = arith.constant 0 : index
    %c0_100 = arith.constant 0 : index
    %90 = vector.load %arg6[%c2_98, %c0_99, %c0_100] : memref<3x1x32xf32, #tpu.memory_space<vmem>>, vector<1x1x32xf32>
    %91 = vector.shape_cast %90 : vector<1x1x32xf32> to vector<1x32xf32>
    %c0_101 = arith.constant 0 : index
    %c7_102 = arith.constant 7 : index
    %c0_103 = arith.constant 0 : index
    %92 = vector.load %arg11[%c0_101, %c7_102, %c0_103] : memref<2x32x32xf32, #tpu.memory_space<vmem>>, vector<2x16x32xf32>
    %93 = vector.shape_cast %92 : vector<2x16x32xf32> to vector<32x32xf32>
    %94 = arith.truncf %93 : vector<32x32xf32> to vector<32x32xbf16>
    %c2_104 = arith.constant 2 : index
    %c0_105 = arith.constant 0 : index
    %c0_106 = arith.constant 0 : index
    %c0_107 = arith.constant 0 : index
    %95 = vector.load %arg5[%c2_104, %c0_105, %c0_106, %c0_107] : memref<3x3x32x32xbf16, #tpu.memory_space<vmem>>, vector<1x1x32x32xbf16>
    %96 = vector.shape_cast %95 : vector<1x1x32x32xbf16> to vector<32x32xbf16>
    %cst_108 = arith.constant dense<0.000000e+00> : vector<32x32xf32>
    %97 = tpu.matmul %94, %96, %cst_108 {dimension_numbers = #tpu.dot_dimension_numbers<[1], [0], [0], [1], [0, 0, 1, 1], [], []>} : vector<32x32xbf16>, vector<32x32xbf16>, vector<32x32xf32> -> vector<32x32xf32>
    %c0_109 = arith.constant 0 : index
    %c8_110 = arith.constant 8 : index
    %c0_111 = arith.constant 0 : index
    %98 = vector.load %arg11[%c0_109, %c8_110, %c0_111] : memref<2x32x32xf32, #tpu.memory_space<vmem>>, vector<2x16x32xf32>
    %99 = vector.shape_cast %98 : vector<2x16x32xf32> to vector<32x32xf32>
    %100 = arith.truncf %99 : vector<32x32xf32> to vector<32x32xbf16>
    %c2_112 = arith.constant 2 : index
    %c1_113 = arith.constant 1 : index
    %c0_114 = arith.constant 0 : index
    %c0_115 = arith.constant 0 : index
    %101 = vector.load %arg5[%c2_112, %c1_113, %c0_114, %c0_115] : memref<3x3x32x32xbf16, #tpu.memory_space<vmem>>, vector<1x1x32x32xbf16>
    %102 = vector.shape_cast %101 : vector<1x1x32x32xbf16> to vector<32x32xbf16>
    %cst_116 = arith.constant dense<0.000000e+00> : vector<32x32xf32>
    %103 = tpu.matmul %100, %102, %cst_116 {dimension_numbers = #tpu.dot_dimension_numbers<[1], [0], [0], [1], [0, 0, 1, 1], [], []>} : vector<32x32xbf16>, vector<32x32xbf16>, vector<32x32xf32> -> vector<32x32xf32>
    %104 = arith.addf %97, %103 : vector<32x32xf32>
    %c0_117 = arith.constant 0 : index
    %c9_118 = arith.constant 9 : index
    %c0_119 = arith.constant 0 : index
    %105 = vector.load %arg11[%c0_117, %c9_118, %c0_119] : memref<2x32x32xf32, #tpu.memory_space<vmem>>, vector<2x16x32xf32>
    %106 = vector.shape_cast %105 : vector<2x16x32xf32> to vector<32x32xf32>
    %107 = arith.truncf %106 : vector<32x32xf32> to vector<32x32xbf16>
    %c2_120 = arith.constant 2 : index
    %c2_121 = arith.constant 2 : index
    %c0_122 = arith.constant 0 : index
    %c0_123 = arith.constant 0 : index
    %108 = vector.load %arg5[%c2_120, %c2_121, %c0_122, %c0_123] : memref<3x3x32x32xbf16, #tpu.memory_space<vmem>>, vector<1x1x32x32xbf16>
    %109 = vector.shape_cast %108 : vector<1x1x32x32xbf16> to vector<32x32xbf16>
    %cst_124 = arith.constant dense<0.000000e+00> : vector<32x32xf32>
    %110 = tpu.matmul %107, %109, %cst_124 {dimension_numbers = #tpu.dot_dimension_numbers<[1], [0], [0], [1], [0, 0, 1, 1], [], []>} : vector<32x32xbf16>, vector<32x32xbf16>, vector<32x32xf32> -> vector<32x32xf32>
    %111 = arith.addf %104, %110 : vector<32x32xf32>
    %112 = vector.broadcast %91 : vector<1x32xf32> to vector<32x32xf32>
    %113 = arith.addf %111, %112 : vector<32x32xf32>
    %cst_125 = arith.constant 0.000000e+00 : f32
    %114 = vector.broadcast %cst_125 : f32 to vector<32x32xf32>
    %115 = arith.maximumf %113, %114 : vector<32x32xf32>
    %116 = vector.shape_cast %115 : vector<32x32xf32> to vector<2x16x32xf32>
    %c0_126 = arith.constant 0 : index
    %c8_127 = arith.constant 8 : index
    %c0_128 = arith.constant 0 : index
    %117 = vector.load %arg10[%c0_126, %c8_127, %c0_128] : memref<2x32x32xf32, #tpu.memory_space<vmem>>, vector<2x16x32xf32>
    tpu.vector_store %arg10[%c0_126, %c8_127, %c0_128], %116 {strides = array<i32>} : memref<2x32x32xf32, #tpu.memory_space<vmem>>, vector<2x16x32xf32>,
    %c0_129 = arith.constant 0 : index
    %c0_130 = arith.constant 0 : index
    %c0_131 = arith.constant 0 : index
    %118 = vector.load %arg6[%c0_129, %c0_130, %c0_131] : memref<3x1x32xf32, #tpu.memory_space<vmem>>, vector<1x1x32xf32>
    %119 = vector.shape_cast %118 : vector<1x1x32xf32> to vector<1x32xf32>
    %c0_132 = arith.constant 0 : index
    %c7_133 = arith.constant 7 : index
    %c0_134 = arith.constant 0 : index
    %120 = vector.load %arg10[%c0_132, %c7_133, %c0_134] : memref<2x32x32xf32, #tpu.memory_space<vmem>>, vector<2x16x32xf32>
    %121 = vector.shape_cast %120 : vector<2x16x32xf32> to vector<32x32xf32>
    %122 = arith.truncf %121 : vector<32x32xf32> to vector<32x32xbf16>
    %c0_135 = arith.constant 0 : index
    %c0_136 = arith.constant 0 : index
    %c0_137 = arith.constant 0 : index
    %c0_138 = arith.constant 0 : index
    %123 = vector.load %arg5[%c0_135, %c0_136, %c0_137, %c0_138] : memref<3x3x32x32xbf16, #tpu.memory_space<vmem>>, vector<1x1x32x32xbf16>
    %124 = vector.shape_cast %123 : vector<1x1x32x32xbf16> to vector<32x32xbf16>
    %cst_139 = arith.constant dense<0.000000e+00> : vector<32x32xf32>
    %125 = tpu.matmul %122, %124, %cst_139 {dimension_numbers = #tpu.dot_dimension_numbers<[1], [0], [0], [1], [0, 0, 1, 1], [], []>} : vector<32x32xbf16>, vector<32x32xbf16>, vector<32x32xf32> -> vector<32x32xf32>
    %c0_140 = arith.constant 0 : index
    %c8_141 = arith.constant 8 : index
    %c0_142 = arith.constant 0 : index
    %126 = vector.load %arg10[%c0_140, %c8_141, %c0_142] : memref<2x32x32xf32, #tpu.memory_space<vmem>>, vector<2x16x32xf32>
    %127 = vector.shape_cast %126 : vector<2x16x32xf32> to vector<32x32xf32>
    %128 = arith.truncf %127 : vector<32x32xf32> to vector<32x32xbf16>
    %c0_143 = arith.constant 0 : index
    %c1_144 = arith.constant 1 : index
    %c0_145 = arith.constant 0 : index
    %c0_146 = arith.constant 0 : index
    %129 = vector.load %arg5[%c0_143, %c1_144, %c0_145, %c0_146] : memref<3x3x32x32xbf16, #tpu.memory_space<vmem>>, vector<1x1x32x32xbf16>
    %130 = vector.shape_cast %129 : vector<1x1x32x32xbf16> to vector<32x32xbf16>
    %cst_147 = arith.constant dense<0.000000e+00> : vector<32x32xf32>
    %131 = tpu.matmul %128, %130, %cst_147 {dimension_numbers = #tpu.dot_dimension_numbers<[1], [0], [0], [1], [0, 0, 1, 1], [], []>} : vector<32x32xbf16>, vector<32x32xbf16>, vector<32x32xf32> -> vector<32x32xf32>
    %132 = arith.addf %125, %131 : vector<32x32xf32>
    %c0_148 = arith.constant 0 : index
    %c9_149 = arith.constant 9 : index
    %c0_150 = arith.constant 0 : index
    %133 = vector.load %arg10[%c0_148, %c9_149, %c0_150] : memref<2x32x32xf32, #tpu.memory_space<vmem>>, vector<2x16x32xf32>
    %134 = vector.shape_cast %133 : vector<2x16x32xf32> to vector<32x32xf32>
    %135 = arith.truncf %134 : vector<32x32xf32> to vector<32x32xbf16>
    %c0_151 = arith.constant 0 : index
    %c2_152 = arith.constant 2 : index
    %c0_153 = arith.constant 0 : index
    %c0_154 = arith.constant 0 : index
    %136 = vector.load %arg5[%c0_151, %c2_152, %c0_153, %c0_154] : memref<3x3x32x32xbf16, #tpu.memory_space<vmem>>, vector<1x1x32x32xbf16>
    %137 = vector.shape_cast %136 : vector<1x1x32x32xbf16> to vector<32x32xbf16>
    %cst_155 = arith.constant dense<0.000000e+00> : vector<32x32xf32>
    %138 = tpu.matmul %135, %137, %cst_155 {dimension_numbers = #tpu.dot_dimension_numbers<[1], [0], [0], [1], [0, 0, 1, 1], [], []>} : vector<32x32xbf16>, vector<32x32xbf16>, vector<32x32xf32> -> vector<32x32xf32>
    %139 = arith.addf %132, %138 : vector<32x32xf32>
    %140 = vector.broadcast %119 : vector<1x32xf32> to vector<32x32xf32>
    %141 = arith.addf %139, %140 : vector<32x32xf32>
    %cst_156 = arith.constant 0.000000e+00 : f32
    %142 = vector.broadcast %cst_156 : f32 to vector<32x32xf32>
    %143 = arith.maximumf %141, %142 : vector<32x32xf32>
    %144 = vector.shape_cast %143 : vector<32x32xf32> to vector<2x16x32xf32>
    %c0_157 = arith.constant 0 : index
    %c8_158 = arith.constant 8 : index
    %c0_159 = arith.constant 0 : index
    %145 = vector.load %arg11[%c0_157, %c8_158, %c0_159] : memref<2x32x32xf32, #tpu.memory_space<vmem>>, vector<2x16x32xf32>
    tpu.vector_store %arg11[%c0_157, %c8_158, %c0_159], %144 {strides = array<i32>} : memref<2x32x32xf32, #tpu.memory_space<vmem>>, vector<2x16x32xf32>,
    %c1_160 = arith.constant 1 : index
    %c0_161 = arith.constant 0 : index
    %c0_162 = arith.constant 0 : index
    %146 = vector.load %arg6[%c1_160, %c0_161, %c0_162] : memref<3x1x32xf32, #tpu.memory_space<vmem>>, vector<1x1x32xf32>
    %147 = vector.shape_cast %146 : vector<1x1x32xf32> to vector<1x32xf32>
    %c0_163 = arith.constant 0 : index
    %c6_164 = arith.constant 6 : index
    %c0_165 = arith.constant 0 : index
    %148 = vector.load %arg11[%c0_163, %c6_164, %c0_165] : memref<2x32x32xf32, #tpu.memory_space<vmem>>, vector<2x16x32xf32>
    %149 = vector.shape_cast %148 : vector<2x16x32xf32> to vector<32x32xf32>
    %150 = arith.truncf %149 : vector<32x32xf32> to vector<32x32xbf16>
    %c1_166 = arith.constant 1 : index
    %c0_167 = arith.constant 0 : index
    %c0_168 = arith.constant 0 : index
    %c0_169 = arith.constant 0 : index
    %151 = vector.load %arg5[%c1_166, %c0_167, %c0_168, %c0_169] : memref<3x3x32x32xbf16, #tpu.memory_space<vmem>>, vector<1x1x32x32xbf16>
    %152 = vector.shape_cast %151 : vector<1x1x32x32xbf16> to vector<32x32xbf16>
    %cst_170 = arith.constant dense<0.000000e+00> : vector<32x32xf32>
    %153 = tpu.matmul %150, %152, %cst_170 {dimension_numbers = #tpu.dot_dimension_numbers<[1], [0], [0], [1], [0, 0, 1, 1], [], []>} : vector<32x32xbf16>, vector<32x32xbf16>, vector<32x32xf32> -> vector<32x32xf32>
    %c0_171 = arith.constant 0 : index
    %c8_172 = arith.constant 8 : index
    %c0_173 = arith.constant 0 : index
    %154 = vector.load %arg11[%c0_171, %c8_172, %c0_173] : memref<2x32x32xf32, #tpu.memory_space<vmem>>, vector<2x16x32xf32>
    %155 = vector.shape_cast %154 : vector<2x16x32xf32> to vector<32x32xf32>
    %156 = arith.truncf %155 : vector<32x32xf32> to vector<32x32xbf16>
    %c1_174 = arith.constant 1 : index
    %c1_175 = arith.constant 1 : index
    %c0_176 = arith.constant 0 : index
    %c0_177 = arith.constant 0 : index
    %157 = vector.load %arg5[%c1_174, %c1_175, %c0_176, %c0_177] : memref<3x3x32x32xbf16, #tpu.memory_space<vmem>>, vector<1x1x32x32xbf16>
    %158 = vector.shape_cast %157 : vector<1x1x32x32xbf16> to vector<32x32xbf16>
    %cst_178 = arith.constant dense<0.000000e+00> : vector<32x32xf32>
    %159 = tpu.matmul %156, %158, %cst_178 {dimension_numbers = #tpu.dot_dimension_numbers<[1], [0], [0], [1], [0, 0, 1, 1], [], []>} : vector<32x32xbf16>, vector<32x32xbf16>, vector<32x32xf32> -> vector<32x32xf32>
    %160 = arith.addf %153, %159 : vector<32x32xf32>
    %c0_179 = arith.constant 0 : index
    %c10_180 = arith.constant 10 : index
    %c0_181 = arith.constant 0 : index
    %161 = vector.load %arg11[%c0_179, %c10_180, %c0_181] : memref<2x32x32xf32, #tpu.memory_space<vmem>>, vector<2x16x32xf32>
    %162 = vector.shape_cast %161 : vector<2x16x32xf32> to vector<32x32xf32>
    %163 = arith.truncf %162 : vector<32x32xf32> to vector<32x32xbf16>
    %c1_182 = arith.constant 1 : index
    %c2_183 = arith.constant 2 : index
    %c0_184 = arith.constant 0 : index
    %c0_185 = arith.constant 0 : index
    %164 = vector.load %arg5[%c1_182, %c2_183, %c0_184, %c0_185] : memref<3x3x32x32xbf16, #tpu.memory_space<vmem>>, vector<1x1x32x32xbf16>
    %165 = vector.shape_cast %164 : vector<1x1x32x32xbf16> to vector<32x32xbf16>
    %cst_186 = arith.constant dense<0.000000e+00> : vector<32x32xf32>
    %166 = tpu.matmul %163, %165, %cst_186 {dimension_numbers = #tpu.dot_dimension_numbers<[1], [0], [0], [1], [0, 0, 1, 1], [], []>} : vector<32x32xbf16>, vector<32x32xbf16>, vector<32x32xf32> -> vector<32x32xf32>
    %167 = arith.addf %160, %166 : vector<32x32xf32>
    %168 = vector.broadcast %147 : vector<1x32xf32> to vector<32x32xf32>
    %169 = arith.addf %167, %168 : vector<32x32xf32>
    %cst_187 = arith.constant 0.000000e+00 : f32
    %170 = vector.broadcast %cst_187 : f32 to vector<32x32xf32>
    %171 = arith.maximumf %169, %170 : vector<32x32xf32>
    %172 = vector.shape_cast %171 : vector<32x32xf32> to vector<2x16x32xf32>
    %c0_188 = arith.constant 0 : index
    %c8_189 = arith.constant 8 : index
    %c0_190 = arith.constant 0 : index
    %173 = vector.load %arg10[%c0_188, %c8_189, %c0_190] : memref<2x32x32xf32, #tpu.memory_space<vmem>>, vector<2x16x32xf32>
    tpu.vector_store %arg10[%c0_188, %c8_189, %c0_190], %172 {strides = array<i32>} : memref<2x32x32xf32, #tpu.memory_space<vmem>>, vector<2x16x32xf32>,
    %c2_191 = arith.constant 2 : index
    %c0_192 = arith.constant 0 : index
    %c0_193 = arith.constant 0 : index
    %174 = vector.load %arg6[%c2_191, %c0_192, %c0_193] : memref<3x1x32xf32, #tpu.memory_space<vmem>>, vector<1x1x32xf32>
    %175 = vector.shape_cast %174 : vector<1x1x32xf32> to vector<1x32xf32>
    %c0_194 = arith.constant 0 : index
    %c7_195 = arith.constant 7 : index
    %c0_196 = arith.constant 0 : index
    %176 = vector.load %arg10[%c0_194, %c7_195, %c0_196] : memref<2x32x32xf32, #tpu.memory_space<vmem>>, vector<2x16x32xf32>
    %177 = vector.shape_cast %176 : vector<2x16x32xf32> to vector<32x32xf32>
    %178 = arith.truncf %177 : vector<32x32xf32> to vector<32x32xbf16>
    %c2_197 = arith.constant 2 : index
    %c0_198 = arith.constant 0 : index
    %c0_199 = arith.constant 0 : index
    %c0_200 = arith.constant 0 : index
    %179 = vector.load %arg5[%c2_197, %c0_198, %c0_199, %c0_200] : memref<3x3x32x32xbf16, #tpu.memory_space<vmem>>, vector<1x1x32x32xbf16>
    %180 = vector.shape_cast %179 : vector<1x1x32x32xbf16> to vector<32x32xbf16>
    %cst_201 = arith.constant dense<0.000000e+00> : vector<32x32xf32>
    %181 = tpu.matmul %178, %180, %cst_201 {dimension_numbers = #tpu.dot_dimension_numbers<[1], [0], [0], [1], [0, 0, 1, 1], [], []>} : vector<32x32xbf16>, vector<32x32xbf16>, vector<32x32xf32> -> vector<32x32xf32>
    %c0_202 = arith.constant 0 : index
    %c8_203 = arith.constant 8 : index
    %c0_204 = arith.constant 0 : index
    %182 = vector.load %arg10[%c0_202, %c8_203, %c0_204] : memref<2x32x32xf32, #tpu.memory_space<vmem>>, vector<2x16x32xf32>
    %183 = vector.shape_cast %182 : vector<2x16x32xf32> to vector<32x32xf32>
    %184 = arith.truncf %183 : vector<32x32xf32> to vector<32x32xbf16>
    %c2_205 = arith.constant 2 : index
    %c1_206 = arith.constant 1 : index
    %c0_207 = arith.constant 0 : index
    %c0_208 = arith.constant 0 : index
    %185 = vector.load %arg5[%c2_205, %c1_206, %c0_207, %c0_208] : memref<3x3x32x32xbf16, #tpu.memory_space<vmem>>, vector<1x1x32x32xbf16>
    %186 = vector.shape_cast %185 : vector<1x1x32x32xbf16> to vector<32x32xbf16>
    %cst_209 = arith.constant dense<0.000000e+00> : vector<32x32xf32>
    %187 = tpu.matmul %184, %186, %cst_209 {dimension_numbers = #tpu.dot_dimension_numbers<[1], [0], [0], [1], [0, 0, 1, 1], [], []>} : vector<32x32xbf16>, vector<32x32xbf16>, vector<32x32xf32> -> vector<32x32xf32>
    %188 = arith.addf %181, %187 : vector<32x32xf32>
    %c0_210 = arith.constant 0 : index
    %c9_211 = arith.constant 9 : index
    %c0_212 = arith.constant 0 : index
    %189 = vector.load %arg10[%c0_210, %c9_211, %c0_212] : memref<2x32x32xf32, #tpu.memory_space<vmem>>, vector<2x16x32xf32>
    %190 = vector.shape_cast %189 : vector<2x16x32xf32> to vector<32x32xf32>
    %191 = arith.truncf %190 : vector<32x32xf32> to vector<32x32xbf16>
    %c2_213 = arith.constant 2 : index
    %c2_214 = arith.constant 2 : index
    %c0_215 = arith.constant 0 : index
    %c0_216 = arith.constant 0 : index
    %192 = vector.load %arg5[%c2_213, %c2_214, %c0_215, %c0_216] : memref<3x3x32x32xbf16, #tpu.memory_space<vmem>>, vector<1x1x32x32xbf16>
    %193 = vector.shape_cast %192 : vector<1x1x32x32xbf16> to vector<32x32xbf16>
    %cst_217 = arith.constant dense<0.000000e+00> : vector<32x32xf32>
    %194 = tpu.matmul %191, %193, %cst_217 {dimension_numbers = #tpu.dot_dimension_numbers<[1], [0], [0], [1], [0, 0, 1, 1], [], []>} : vector<32x32xbf16>, vector<32x32xbf16>, vector<32x32xf32> -> vector<32x32xf32>
    %195 = arith.addf %188, %194 : vector<32x32xf32>
    %196 = vector.broadcast %175 : vector<1x32xf32> to vector<32x32xf32>
    %197 = arith.addf %195, %196 : vector<32x32xf32>
    %cst_218 = arith.constant 0.000000e+00 : f32
    %198 = vector.broadcast %cst_218 : f32 to vector<32x32xf32>
    %199 = arith.maximumf %197, %198 : vector<32x32xf32>
    %200 = vector.shape_cast %199 : vector<32x32xf32> to vector<2x16x32xf32>
    %c0_219 = arith.constant 0 : index
    %c8_220 = arith.constant 8 : index
    %c0_221 = arith.constant 0 : index
    %201 = vector.load %arg11[%c0_219, %c8_220, %c0_221] : memref<2x32x32xf32, #tpu.memory_space<vmem>>, vector<2x16x32xf32>
    tpu.vector_store %arg11[%c0_219, %c8_220, %c0_221], %200 {strides = array<i32>} : memref<2x32x32xf32, #tpu.memory_space<vmem>>, vector<2x16x32xf32>,
    %c0_222 = arith.constant 0 : index
    %c8_223 = arith.constant 8 : index
    %c0_224 = arith.constant 0 : index
    %202 = vector.load %arg11[%c0_222, %c8_223, %c0_224] : memref<2x32x32xf32, #tpu.memory_space<vmem>>, vector<2x16x32xf32>
    %203 = vector.shape_cast %202 : vector<2x16x32xf32> to vector<32x32xf32>
    %204 = arith.truncf %203 : vector<32x32xf32> to vector<32x32xbf16>
    %c0_225 = arith.constant 0 : index
    %c0_226 = arith.constant 0 : index
    %205 = vector.load %arg7[%c0_225, %c0_226] : memref<32x8xbf16, #tpu.memory_space<vmem>>, vector<32x8xbf16>
    %cst_227 = arith.constant dense<0.000000e+00> : vector<32x8xf32>
    %206 = tpu.matmul %204, %205, %cst_227 {dimension_numbers = #tpu.dot_dimension_numbers<[1], [0], [0], [1], [0, 0, 1, 1], [], []>} : vector<32x32xbf16>, vector<32x8xbf16>, vector<32x8xf32> -> vector<32x8xf32>
    %c0_228 = arith.constant 0 : index
    %c0_229 = arith.constant 0 : index
    %207 = vector.load %arg8[%c0_228, %c0_229] : memref<1x8xf32, #tpu.memory_space<vmem>>, vector<1x8xf32>
    %208 = vector.broadcast %207 : vector<1x8xf32> to vector<32x8xf32>
    %209 = arith.addf %206, %208 : vector<32x8xf32>
    %210 = tpu.iota {dimensions = array<i32: 1>} : vector<32x8xi32>
    %cst_230 = arith.constant dense<0xFF800000> : vector<32xf32>
    %211 = vector.multi_reduction <maximumf>, %209, %cst_230 [1] : vector<32x8xf32> to vector<32xf32>
    %212 = vector.shape_cast %211 : vector<32xf32> to vector<32x1xf32>
    %213 = vector.broadcast %212 : vector<32x1xf32> to vector<32x8xf32>
    %214 = arith.cmpf oeq, %209, %213 : vector<32x8xf32>
    %c8_i32 = arith.constant 8 : i32
    %215 = vector.broadcast %c8_i32 : i32 to vector<32x8xi32>
    %216 = arith.select %214, %210, %215 : vector<32x8xi1>, vector<32x8xi32>
    %cst_231 = arith.constant dense<2147483647> : vector<32xi32>
    %217 = vector.multi_reduction <minsi>, %216, %cst_231 [1] : vector<32x8xi32> to vector<32xi32>
    %218 = vector.shape_cast %217 : vector<32xi32> to vector<32x1xi32>
    %219 = vector.shape_cast %218 : vector<32x1xi32> to vector<2x16xi32>
    %220 = tpu.iota {dimensions = array<i32: 1>} : vector<2x16xi32>
    %c0_232 = arith.constant 0 : index
    %c0_233 = arith.constant 0 : index
    %221 = vector.load %arg2[%c0_232, %c0_233] : memref<2x1xi32, #tpu.memory_space<vmem>>, vector<2x1xi32>
    %222 = vector.broadcast %221 : vector<2x1xi32> to vector<2x16xi32>
    %223 = arith.cmpi slt, %220, %222 : vector<2x16xi32>
    %c0_i32 = arith.constant 0 : i32
    %224 = vector.broadcast %c0_i32 : i32 to vector<2x16xi32>
    %225 = arith.select %223, %219, %224 : vector<2x16xi1>, vector<2x16xi32>
    %c0_234 = arith.constant 0 : index
    %c0_235 = arith.constant 0 : index
    %226 = vector.load %arg9[%c0_234, %c0_235] : memref<2x16xi32, #tpu.memory_space<vmem>>, vector<2x16xi32>
    tpu.vector_store %arg9[%c0_234, %c0_235], %225 {strides = array<i32>} : memref<2x16xi32, #tpu.memory_space<vmem>>, vector<2x16xi32>,
    return
  }
  func.func @transform_0(%arg0: i32) -> (i32, i32, i32) {
    %c0_i32 = arith.constant 0 : i32
    %c0_i32_0 = arith.constant 0 : i32
    %c0_i32_1 = arith.constant 0 : i32
    return %arg0, %c0_i32, %c0_i32_0 : i32, i32, i32
  }
  func.func @transform_1(%arg0: i32) -> (i32, i32) {
    %c0_i32 = arith.constant 0 : i32
    %c0_i32_0 = arith.constant 0 : i32
    return %arg0, %c0_i32 : i32, i32
  }
  func.func @transform_2(%arg0: i32) -> (i32, i32, i32) {
    %c0_i32 = arith.constant 0 : i32
    %c0_i32_0 = arith.constant 0 : i32
    %c0_i32_1 = arith.constant 0 : i32
    %c0_i32_2 = arith.constant 0 : i32
    return %c0_i32, %c0_i32_0, %c0_i32_1 : i32, i32, i32
  }
  func.func @transform_3(%arg0: i32) -> (i32, i32) {
    %c0_i32 = arith.constant 0 : i32
    %c0_i32_0 = arith.constant 0 : i32
    %c0_i32_1 = arith.constant 0 : i32
    return %c0_i32, %c0_i32_0 : i32, i32
  }
  func.func @transform_4(%arg0: i32) -> (i32, i32, i32, i32) {
    %c0_i32 = arith.constant 0 : i32
    %c0_i32_0 = arith.constant 0 : i32
    %c0_i32_1 = arith.constant 0 : i32
    %c0_i32_2 = arith.constant 0 : i32
    %c0_i32_3 = arith.constant 0 : i32
    return %c0_i32, %c0_i32_0, %c0_i32_1, %c0_i32_2 : i32, i32, i32, i32
  }
  func.func @transform_5(%arg0: i32) -> (i32, i32, i32) {
    %c0_i32 = arith.constant 0 : i32
    %c0_i32_0 = arith.constant 0 : i32
    %c0_i32_1 = arith.constant 0 : i32
    %c0_i32_2 = arith.constant 0 : i32
    return %c0_i32, %c0_i32_0, %c0_i32_1 : i32, i32, i32
  }
  func.func @transform_6(%arg0: i32) -> (i32, i32) {
    %c0_i32 = arith.constant 0 : i32
    %c0_i32_0 = arith.constant 0 : i32
    %c0_i32_1 = arith.constant 0 : i32
    return %c0_i32, %c0_i32_0 : i32, i32
  }
  func.func @transform_7(%arg0: i32) -> (i32, i32) {
    %c0_i32 = arith.constant 0 : i32
    %c0_i32_0 = arith.constant 0 : i32
    %c0_i32_1 = arith.constant 0 : i32
    return %c0_i32, %c0_i32_0 : i32, i32
  }
  func.func @transform_8(%arg0: i32) -> (i32, i32) {
    %c0_i32 = arith.constant 0 : i32
    %c0_i32_0 = arith.constant 0 : i32
    return %arg0, %c0_i32 : i32, i32
  }
}

</mosaic_0001>

<llo_original>
// kernel: tpu_custom_call.1
$region0: #{tpu_custom_call.1}
  #allocation0 [shape = 'u32[]', space=smem, size = 0x4, offset = 0x4, fixed_abs, tag = 'smem constant byte address 0x4 - core index']
  #allocation1 [shape = 'u32[144,128]{1,0:T(1,128)}', space=vmem, size = 0x12000, scoped, tag = 'internal scratch']
  #allocation2 [shape = 'f32[2,32,32]{2,1,0:T(8,128)}', space=vmem, size = 0x8000, scoped, tag = 'scratch operand']
  #allocation3 [shape = 'f32[2,32,32]{2,1,0:T(8,128)}', space=vmem, size = 0x8000, scoped, tag = 'scratch operand']
  %s0 = inlined_call_operand.hbm [shape: f32[2,16,32], index: 0, kind: input, shape index: {}]
  %s1 = inlined_call_operand.vmem [shape: s32[2,1], index: 1, kind: input, shape index: {}]
  %s2 = inlined_call_operand.hbm [shape: bf16[3,32,32], index: 2, kind: input, shape index: {}]
  %s3 = inlined_call_operand.vmem [shape: f32[1,32], index: 3, kind: input, shape index: {}]
  %s4 = inlined_call_operand.hbm [shape: bf16[3,3,32,32], index: 4, kind: input, shape index: {}]
  %s5 = inlined_call_operand.vmem [shape: f32[3,1,32], index: 5, kind: input, shape index: {}]
  %s6 = inlined_call_operand.vmem [shape: bf16[32,8], index: 6, kind: input, shape index: {}]
  %s7 = inlined_call_operand.vmem [shape: f32[1,8], index: 7, kind: input, shape index: {}]
  %s8 = inlined_call_operand.hbm [shape: s32[2,16], index: 8, kind: output, shape index: {}]
  %s9 = sld [smem:[#allocation0]]
  $region54: #{tpu_custom_call.1} parent=0
    _
  %s11 = ssub.s32 1, %s9
  %s12 = scalar_select 0, %s11, %s9
  $region1: #{tpu_custom_call.1} parent=0
    #allocation4 [shape = 'u8[16384]{0}', space=vmem, size = 0x4000, scoped, tag = 'input window, operand 0, single buffered']
    #allocation5 [shape = 's32[1]{0}', space=sflag, size = 0x4, scoped, tag = 'scoped memory for tpu_custom_call.1']
    #allocation6 [shape = 's32[1]{0}', space=sflag, size = 0x4, scoped, tag = 'scoped memory for tpu_custom_call.1']
    #allocation7 [shape = 'u8[24576]{0}', space=vmem, size = 0x6000, scoped, tag = 'input window, operand 2, single buffered']
    #allocation8 [shape = 's32[1]{0}', space=sflag, size = 0x4, scoped, tag = 'scoped memory for tpu_custom_call.1']
    #allocation9 [shape = 'u8[73728]{0}', space=vmem, size = 0x12000, scoped, tag = 'input window, operand 4, single buffered']
    #allocation10 [shape = 'u8[1024]{0}', space=vmem, size = 0x400, scoped, tag = 'output window, operand 0, single buffered']
    %13 = vsyncpa [#allocation5], 0
    %14 = vsyncpa [#allocation8], 0
    %15 = vsyncpa [#allocation6], 0
    // Predicated region
    $region2: #{tpu_custom_call.1} parent=1 // pred_check
      _
    $region3: #{tpu_custom_call.1} parent=1 // pred_check_branch
      %17 = sbr.rel (0) target = $region5
    $region4: #{tpu_custom_call.1} parent=1 // pred_region
      %s19 = ssub.s32 512, 512
      %20 = vsyncadd [#allocation5], %s19
      %s21 = sshll.u32 [#allocation4], 4
      %s22 = int_to_ptr.vmem [resolvable:$true] %s21
      %27 = dma.hbm_to_vmem [thread:$0]  %s0, 512, %s22, [#allocation5], 128, 128, 8
    $region5: #{tpu_custom_call.1} parent=1 // pred_fallthru
      _
    // Predicated region
    $region6: #{tpu_custom_call.1} parent=1 // pred_check
      _
    $region7: #{tpu_custom_call.1} parent=1 // pred_check_branch
      %29 = sbr.rel (0) target = $region9
    $region8: #{tpu_custom_call.1} parent=1 // pred_region
      _
    $region9: #{tpu_custom_call.1} parent=1 // pred_fallthru
      _
    // Predicated region
    $region10: #{tpu_custom_call.1} parent=1 // pred_check
      _
    $region11: #{tpu_custom_call.1} parent=1 // pred_check_branch
      %31 = sbr.rel (0) target = $region13
    $region12: #{tpu_custom_call.1} parent=1 // pred_region
      %s33 = ssub.s32 768, 768
      %34 = vsyncadd [#allocation8], %s33
      %s35 = sshll.u32 [#allocation7], 4
      %s36 = int_to_ptr.vmem [resolvable:$true] %s35
      %41 = dma.hbm_to_vmem [thread:$0]  %s2, 768, %s36, [#allocation8], 64, 64, 4
    $region13: #{tpu_custom_call.1} parent=1 // pred_fallthru
      _
    // Predicated region
    $region14: #{tpu_custom_call.1} parent=1 // pred_check
      _
    $region15: #{tpu_custom_call.1} parent=1 // pred_check_branch
      %43 = sbr.rel (0) target = $region17
    $region16: #{tpu_custom_call.1} parent=1 // pred_region
      _
    $region17: #{tpu_custom_call.1} parent=1 // pred_fallthru
      _
    // Predicated region
    $region18: #{tpu_custom_call.1} parent=1 // pred_check
      _
    $region19: #{tpu_custom_call.1} parent=1 // pred_check_branch
      %45 = sbr.rel (0) target = $region21
    $region20: #{tpu_custom_call.1} parent=1 // pred_region
      %s47 = ssub.s32 2304, 2304
      %48 = vsyncadd [#allocation8], %s47
      %s49 = sshll.u32 [#allocation9], 4
      %s50 = int_to_ptr.vmem [resolvable:$true] %s49
      %55 = dma.hbm_to_vmem [thread:$0]  %s4, 2304, %s50, [#allocation8], 64, 64, 4
    $region21: #{tpu_custom_call.1} parent=1 // pred_fallthru
      _
    // Predicated region
    $region22: #{tpu_custom_call.1} parent=1 // pred_check
      _
    $region23: #{tpu_custom_call.1} parent=1 // pred_check_branch
      %57 = sbr.rel (0) target = $region25
    $region24: #{tpu_custom_call.1} parent=1 // pred_region
      _
    $region25: #{tpu_custom_call.1} parent=1 // pred_fallthru
      _
    // Predicated region
    $region26: #{tpu_custom_call.1} parent=1 // pred_check
      _
    $region27: #{tpu_custom_call.1} parent=1 // pred_check_branch
      %59 = sbr.rel (0) target = $region29
    $region28: #{tpu_custom_call.1} parent=1 // pred_region
      _
    $region29: #{tpu_custom_call.1} parent=1 // pred_fallthru
      _
    // Predicated region
    $region30: #{tpu_custom_call.1} parent=1 // pred_check
      _
    $region31: #{tpu_custom_call.1} parent=1 // pred_check_branch
      %61 = sbr.rel (0) target = $region33
    $region32: #{tpu_custom_call.1} parent=1 // pred_region
      _
    $region33: #{tpu_custom_call.1} parent=1 // pred_fallthru
      _
    // Predicated region
    $region34: #{tpu_custom_call.1} parent=1 // pred_check
      _
    $region35: #{tpu_custom_call.1} parent=1 // pred_check_branch
      %63 = sbr.rel (0) target = $region37
    $region36: #{tpu_custom_call.1} parent=1 // pred_region
      %64 = dma.done [#allocation5], 512
    $region37: #{tpu_custom_call.1} parent=1 // pred_fallthru
      _
    // Predicated region
    $region38: #{tpu_custom_call.1} parent=1 // pred_check
      _
    $region39: #{tpu_custom_call.1} parent=1 // pred_check_branch
      %66 = sbr.rel (0) target = $region41
    $region40: #{tpu_custom_call.1} parent=1 // pred_region
      %67 = dma.done [#allocation8], 768
    $region41: #{tpu_custom_call.1} parent=1 // pred_fallthru
      _
    // Predicated region
    $region42: #{tpu_custom_call.1} parent=1 // pred_check
      _
    $region43: #{tpu_custom_call.1} parent=1 // pred_check_branch
      %69 = sbr.rel (0) target = $region45
    $region44: #{tpu_custom_call.1} parent=1 // pred_region
      %70 = dma.done [#allocation8], 2304
    $region45: #{tpu_custom_call.1} parent=1 // pred_fallthru
      _
    %vm72 = vcmask 261120
    %73 = vst.msk [vmem:[#allocation2] sm:$0xff] %vm72, 0.0
    %74 = vst.msk [vmem:[#allocation2 + $0x20] sm:$0xff] %vm72, 0.0
    %75 = vst.msk [vmem:[#allocation2 + $0x18] sm:$0xff] %vm72, 0.0
    %76 = vst.msk [vmem:[#allocation2 + $0x38] sm:$0xff] %vm72, 0.0
    %77 = vst.msk [vmem:[#allocation3] sm:$0xff] %vm72, 0.0
    %78 = vst.msk [vmem:[#allocation3 + $0x20] sm:$0xff] %vm72, 0.0
    %79 = vst.msk [vmem:[#allocation3 + $0x18] sm:$0xff] %vm72, 0.0
    %80 = vst.msk [vmem:[#allocation3 + $0x38] sm:$0xff] %vm72, 0.0
    %v81 = vld [vmem:[#allocation4] sm:$0xff]
    %v82 = vld [vmem:[#allocation4 + $0x8] sm:$0xff]
    %v83 = vld [vmem:[#allocation4 + $0x10] sm:$0xff]
    %v84 = vld [vmem:[#allocation4 + $0x18] sm:$0xff]
    %85 = vst.msk [vmem:[#allocation2 + $0x8] sm:$0xff] %vm72, %v81
    %86 = vst.msk [vmem:[#allocation2 + $0x10] sm:$0xff] %vm72, %v82
    %87 = vst.msk [vmem:[#allocation2 + $0x28] sm:$0xff] %vm72, %v83
    %88 = vst.msk [vmem:[#allocation2 + $0x30] sm:$0xff] %vm72, %v84
    %v89 = vld [vmem:[%s3] sm:$0x1]
    %v90 = vld [vmem:[#allocation2 + $0x7] sm:$0xff]
    %v91 = vld [vmem:[#allocation2 + $0xf] sm:$0xff]
    %v92 = vld [vmem:[#allocation2 + $0x27] sm:$0xff]
    %v93 = vld [vmem:[#allocation2 + $0x2f] sm:$0xff]
    %v94 = vpack.c.bf16 %v91, %v90
    %v95 = vpack.c.bf16 %v93, %v92
    %v96 = vld [vmem:[#allocation7] sm:$0xf]
    %v97 = vld [vmem:[#allocation7 + $0x4] sm:$0xf]
    %v98 = vld [vmem:[#allocation7 + $0x8] sm:$0xf]
    %v99 = vld [vmem:[#allocation7 + $0xc] sm:$0xf]
    %v100 = vld [vmem:[#allocation2 + $0x8] sm:$0xff]
    %v101 = vld [vmem:[#allocation2 + $0x10] sm:$0xff]
    %v102 = vld [vmem:[#allocation2 + $0x28] sm:$0xff]
    %v103 = vld [vmem:[#allocation2 + $0x30] sm:$0xff]
    %v104 = vpack.c.bf16 %v101, %v100
    %v105 = vpack.c.bf16 %v103, %v102
    %s106 = scalar_lea.vmem [#allocation7], 16
    %v107 = vld [vmem:[%s106] sm:$0xf]
    %v108 = vld [vmem:[%s106 + $0x4] sm:$0xf]
    %v109 = vld [vmem:[%s106 + $0x8] sm:$0xf]
    %v110 = vld [vmem:[%s106 + $0xc] sm:$0xf]
    %v115 = vunpack.c.l.b16 %v107
    %v116 = vunpack.c.l.b16 %v108
    %v117 = vunpack.c.l.b16 %v109
    %v118 = vunpack.c.l.b16 %v110
    %v119 = vpack.c.b16 %v116, %v115
    %v120 = vpack.c.b16 %v118, %v117
    %v124 = vsel %vm72, %v104, 0
    %v127 = vsel %vm72, %v105, 0
    %129 = vmatprep.subr.bf16.mxu0 0
    %130 = vmatpush1.bf16.msra.mxu0 %v119
    %131 = vmatprep.subr.bf16.mxu0 0
    %132 = vmatpush1.bf16.msra.mxu0 %v120
    %133 = vmatprep.subr.bf16.mxu0 0
    %134 = vmatpush1.bf16.msra.mxu0 0
    %135 = vmatprep.subr.bf16.mxu0 0
    %136 = vmatpush1.bf16.msra.mxu0 0
    %137 = vmatprep.subr.bf16.mxu0 0
    %138 = vmatpush1.bf16.msra.mxu0 0
    %139 = vmatprep.subr.bf16.mxu0 0
    %140 = vmatpush1.bf16.msra.mxu0 0
    %141 = vmatprep.subr.bf16.mxu0 0
    %142 = vmatpush1.bf16.msra.mxu0 0
    %143 = vmatprep.subr.bf16.mxu0 0
    %144 = vmatpush1.bf16.msra.mxu0 0
    %145 = vmatprep.subr.bf16.mxu0 0
    %146 = vmatpush1.bf16.msra.mxu0 0
    %147 = vmatprep.subr.bf16.mxu0 0
    %148 = vmatpush1.bf16.msra.mxu0 0
    %149 = vmatprep.subr.bf16.mxu0 0
    %150 = vmatpush1.bf16.msra.mxu0 0
    %151 = vmatprep.subr.bf16.mxu0 0
    %152 = vmatpush1.bf16.msra.mxu0 0
    %153 = vmatprep.subr.bf16.mxu0 0
    %154 = vmatpush1.bf16.msra.mxu0 0
    %155 = vmatprep.subr.bf16.mxu0 0
    %156 = vmatpush1.bf16.msra.mxu0 0
    %157 = vmatprep.subr.bf16.mxu0 0
    %158 = vmatpush1.bf16.msra.mxu0 0
    %159 = vmatprep.subr.bf16.mxu0 0
    %160 = vmatpush1.bf16.msra.mxu0 0
    %161 = vmatprep.mubr.bf16.mxu0 0
    %162 = vmatmul.mubr.bf16.gmra.mrb[0].mxu0 %v124
    %v163 = vpop.f32.mrb[0].mxu0
    %v164 = vadd.f32 0.0, %v163
    %v165 = vpop.f32.mrb[0].mxu0
    %v166 = vpop.f32.mrb[0].mxu0
    %v167 = vadd.f32 0.0, %v166
    %v168 = vpop.f32.mrb[0].mxu0
    %169 = vmatprep.mubr.bf16.mxu0 0
    %170 = vmatmul.mubr.bf16.gmra.mrb[0].mxu0 %v127
    %v171 = vpop.f32.mrb[0].mxu0
    %v172 = vadd.f32 0.0, %v171
    %v173 = vpop.f32.mrb[0].mxu0
    %v174 = vpop.f32.mrb[0].mxu0
    %v175 = vadd.f32 0.0, %v174
    %v176 = vpop.f32.mrb[0].mxu0
    %177 = vdwg.mxu0
    %v182 = vunpack.c.l.b16 %v96
    %v183 = vunpack.c.l.b16 %v97
    %v184 = vunpack.c.l.b16 %v98
    %v185 = vunpack.c.l.b16 %v99
    %v186 = vpack.c.b16 %v183, %v182
    %v187 = vpack.c.b16 %v185, %v184
    %v191 = vsel %vm72, %v94, 0
    %v194 = vsel %vm72, %v95, 0
    %196 = vmatprep.subr.bf16.mxu0 0
    %197 = vmatpush1.bf16.msra.mxu0 %v186
    %198 = vmatprep.subr.bf16.mxu0 0
    %199 = vmatpush1.bf16.msra.mxu0 %v187
    %200 = vmatprep.subr.bf16.mxu0 0
    %201 = vmatpush1.bf16.msra.mxu0 0
    %202 = vmatprep.subr.bf16.mxu0 0
    %203 = vmatpush1.bf16.msra.mxu0 0
    %204 = vmatprep.subr.bf16.mxu0 0
    %205 = vmatpush1.bf16.msra.mxu0 0
    %206 = vmatprep.subr.bf16.mxu0 0
    %207 = vmatpush1.bf16.msra.mxu0 0
    %208 = vmatprep.subr.bf16.mxu0 0
    %209 = vmatpush1.bf16.msra.mxu0 0
    %210 = vmatprep.subr.bf16.mxu0 0
    %211 = vmatpush1.bf16.msra.mxu0 0
    %212 = vmatprep.subr.bf16.mxu0 0
    %213 = vmatpush1.bf16.msra.mxu0 0
    %214 = vmatprep.subr.bf16.mxu0 0
    %215 = vmatpush1.bf16.msra.mxu0 0
    %216 = vmatprep.subr.bf16.mxu0 0
    %217 = vmatpush1.bf16.msra.mxu0 0
    %218 = vmatprep.subr.bf16.mxu0 0
    %219 = vmatpush1.bf16.msra.mxu0 0
    %220 = vmatprep.subr.bf16.mxu0 0
    %221 = vmatpush1.bf16.msra.mxu0 0
    %222 = vmatprep.subr.bf16.mxu0 0
    %223 = vmatpush1.bf16.msra.mxu0 0
    %224 = vmatprep.subr.bf16.mxu0 0
    %225 = vmatpush1.bf16.msra.mxu0 0
    %226 = vmatprep.subr.bf16.mxu0 0
    %227 = vmatpush1.bf16.msra.mxu0 0
    %228 = vmatprep.mubr.bf16.mxu0 0
    %229 = vmatmul.mubr.bf16.gmra.mrb[0].mxu0 %v191
    %v230 = vpop.f32.mrb[0].mxu0
    %v231 = vadd.f32 %v164, %v230
    %v232 = vpop.f32.mrb[0].mxu0
    %v233 = vpop.f32.mrb[0].mxu0
    %v234 = vadd.f32 %v167, %v233
    %v235 = vpop.f32.mrb[0].mxu0
    %236 = vmatprep.mubr.bf16.mxu0 0
    %237 = vmatmul.mubr.bf16.gmra.mrb[0].mxu0 %v194
    %v238 = vpop.f32.mrb[0].mxu0
    %v239 = vadd.f32 %v172, %v238
    %v240 = vpop.f32.mrb[0].mxu0
    %v241 = vpop.f32.mrb[0].mxu0
    %v242 = vadd.f32 %v175, %v241
    %v243 = vpop.f32.mrb[0].mxu0
    %244 = vdwg.mxu0
    %v245 = vld [vmem:[#allocation2 + $0x9] sm:$0xff]
    %v246 = vld [vmem:[#allocation2 + $0x11] sm:$0xff]
    %v247 = vld [vmem:[#allocation2 + $0x29] sm:$0xff]
    %v248 = vld [vmem:[#allocation2 + $0x31] sm:$0xff]
    %v249 = vpack.c.bf16 %v246, %v245
    %v250 = vpack.c.bf16 %v248, %v247
    %s251 = scalar_lea.vmem [#allocation7], 32
    %v252 = vld [vmem:[%s251] sm:$0xf]
    %v253 = vld [vmem:[%s251 + $0x4] sm:$0xf]
    %v254 = vld [vmem:[%s251 + $0x8] sm:$0xf]
    %v255 = vld [vmem:[%s251 + $0xc] sm:$0xf]
    %v260 = vunpack.c.l.b16 %v252
    %v261 = vunpack.c.l.b16 %v253
    %v262 = vunpack.c.l.b16 %v254
    %v263 = vunpack.c.l.b16 %v255
    %v264 = vpack.c.b16 %v261, %v260
    %v265 = vpack.c.b16 %v263, %v262
    %v269 = vsel %vm72, %v249, 0
    %v272 = vsel %vm72, %v250, 0
    %274 = vmatprep.subr.bf16.mxu0 0
    %275 = vmatpush1.bf16.msra.mxu0 %v264
    %276 = vmatprep.subr.bf16.mxu0 0
    %277 = vmatpush1.bf16.msra.mxu0 %v265
    %278 = vmatprep.subr.bf16.mxu0 0
    %279 = vmatpush1.bf16.msra.mxu0 0
    %280 = vmatprep.subr.bf16.mxu0 0
    %281 = vmatpush1.bf16.msra.mxu0 0
    %282 = vmatprep.subr.bf16.mxu0 0
    %283 = vmatpush1.bf16.msra.mxu0 0
    %284 = vmatprep.subr.bf16.mxu0 0
    %285 = vmatpush1.bf16.msra.mxu0 0
    %286 = vmatprep.subr.bf16.mxu0 0
    %287 = vmatpush1.bf16.msra.mxu0 0
    %288 = vmatprep.subr.bf16.mxu0 0
    %289 = vmatpush1.bf16.msra.mxu0 0
    %290 = vmatprep.subr.bf16.mxu0 0
    %291 = vmatpush1.bf16.msra.mxu0 0
    %292 = vmatprep.subr.bf16.mxu0 0
    %293 = vmatpush1.bf16.msra.mxu0 0
    %294 = vmatprep.subr.bf16.mxu0 0
    %295 = vmatpush1.bf16.msra.mxu0 0
    %296 = vmatprep.subr.bf16.mxu0 0
    %297 = vmatpush1.bf16.msra.mxu0 0
    %298 = vmatprep.subr.bf16.mxu0 0
    %299 = vmatpush1.bf16.msra.mxu0 0
    %300 = vmatprep.subr.bf16.mxu0 0
    %301 = vmatpush1.bf16.msra.mxu0 0
    %302 = vmatprep.subr.bf16.mxu0 0
    %303 = vmatpush1.bf16.msra.mxu0 0
    %304 = vmatprep.subr.bf16.mxu0 0
    %305 = vmatpush1.bf16.msra.mxu0 0
    %306 = vmatprep.mubr.bf16.mxu0 0
    %307 = vmatmul.mubr.bf16.gmra.mrb[0].mxu0 %v269
    %v308 = vpop.f32.mrb[0].mxu0
    %v309 = vadd.f32 0.0, %v308
    %v310 = vpop.f32.mrb[0].mxu0
    %v311 = vpop.f32.mrb[0].mxu0
    %v312 = vadd.f32 0.0, %v311
    %v313 = vpop.f32.mrb[0].mxu0
    %314 = vmatprep.mubr.bf16.mxu0 0
    %315 = vmatmul.mubr.bf16.gmra.mrb[0].mxu0 %v272
    %v316 = vpop.f32.mrb[0].mxu0
    %v317 = vadd.f32 0.0, %v316
    %v318 = vpop.f32.mrb[0].mxu0
    %v319 = vpop.f32.mrb[0].mxu0
    %v320 = vadd.f32 0.0, %v319
    %v321 = vpop.f32.mrb[0].mxu0
    %322 = vdwg.mxu0
    %v323 = vadd.f32 %v231, %v309
    %v324 = vadd.f32 %v234, %v312
    %v325 = vadd.f32 %v239, %v317
    %v326 = vadd.f32 %v242, %v320
    %v328 = vlaneseq
    %v329 = vshrl.u32 %v328, 7
    %v330 = vsub.s32 0, %v329
    %v331 = vrot.slane %v89, %v330
    %v333 = vadd.f32 %v323, %v331
    %v334 = vadd.f32 %v324, %v331
    %v335 = vadd.f32 %v325, %v331
    %v336 = vadd.f32 %v326, %v331
    %v337 = vmax.f32 %v333, 0.0
    %v338 = vmax.f32 %v334, 0.0
    %v339 = vmax.f32 %v335, 0.0
    %v340 = vmax.f32 %v336, 0.0
    %341 = vst.msk [vmem:[#allocation3 + $0x8] sm:$0xff] %vm72, %v337
    %342 = vst.msk [vmem:[#allocation3 + $0x10] sm:$0xff] %vm72, %v338
    %343 = vst.msk [vmem:[#allocation3 + $0x28] sm:$0xff] %vm72, %v339
    %344 = vst.msk [vmem:[#allocation3 + $0x30] sm:$0xff] %vm72, %v340
    %v345 = vld [vmem:[%s5] sm:$0x1]
    %v346 = vld [vmem:[#allocation3 + $0x7] sm:$0xff]
    %v347 = vld [vmem:[#allocation3 + $0xf] sm:$0xff]
    %v348 = vld [vmem:[#allocation3 + $0x27] sm:$0xff]
    %v349 = vld [vmem:[#allocation3 + $0x2f] sm:$0xff]
    %v350 = vpack.c.bf16 %v347, %v346
    %v351 = vpack.c.bf16 %v349, %v348
    %v352 = vld [vmem:[#allocation9] sm:$0xf]
    %v353 = vld [vmem:[#allocation9 + $0x4] sm:$0xf]
    %v354 = vld [vmem:[#allocation9 + $0x8] sm:$0xf]
    %v355 = vld [vmem:[#allocation9 + $0xc] sm:$0xf]
    %v356 = vld [vmem:[#allocation3 + $0x8] sm:$0xff]
    %v357 = vld [vmem:[#allocation3 + $0x10] sm:$0xff]
    %v358 = vld [vmem:[#allocation3 + $0x28] sm:$0xff]
    %v359 = vld [vmem:[#allocation3 + $0x30] sm:$0xff]
    %v360 = vpack.c.bf16 %v357, %v356
    %v361 = vpack.c.bf16 %v359, %v358
    %s362 = scalar_lea.vmem [#allocation9], 16
    %v363 = vld [vmem:[%s362] sm:$0xf]
    %v364 = vld [vmem:[%s362 + $0x4] sm:$0xf]
    %v365 = vld [vmem:[%s362 + $0x8] sm:$0xf]
    %v366 = vld [vmem:[%s362 + $0xc] sm:$0xf]
    %v371 = vunpack.c.l.b16 %v363
    %v372 = vunpack.c.l.b16 %v364
    %v373 = vunpack.c.l.b16 %v365
    %v374 = vunpack.c.l.b16 %v366
    %v375 = vpack.c.b16 %v372, %v371
    %v376 = vpack.c.b16 %v374, %v373
    %v380 = vsel %vm72, %v360, 0
    %v383 = vsel %vm72, %v361, 0
    %385 = vmatprep.subr.bf16.mxu0 0
    %386 = vmatpush1.bf16.msra.mxu0 %v375
    %387 = vmatprep.subr.bf16.mxu0 0
    %388 = vmatpush1.bf16.msra.mxu0 %v376
    %389 = vmatprep.subr.bf16.mxu0 0
    %390 = vmatpush1.bf16.msra.mxu0 0
    %391 = vmatprep.subr.bf16.mxu0 0
    %392 = vmatpush1.bf16.msra.mxu0 0
    %393 = vmatprep.subr.bf16.mxu0 0
    %394 = vmatpush1.bf16.msra.mxu0 0
    %395 = vmatprep.subr.bf16.mxu0 0
    %396 = vmatpush1.bf16.msra.mxu0 0
    %397 = vmatprep.subr.bf16.mxu0 0
    %398 = vmatpush1.bf16.msra.mxu0 0
    %399 = vmatprep.subr.bf16.mxu0 0
    %400 = vmatpush1.bf16.msra.mxu0 0
    %401 = vmatprep.subr.bf16.mxu0 0
    %402 = vmatpush1.bf16.msra.mxu0 0
    %403 = vmatprep.subr.bf16.mxu0 0
    %404 = vmatpush1.bf16.msra.mxu0 0
    %405 = vmatprep.subr.bf16.mxu0 0
    %406 = vmatpush1.bf16.msra.mxu0 0
    %407 = vmatprep.subr.bf16.mxu0 0
    %408 = vmatpush1.bf16.msra.mxu0 0
    %409 = vmatprep.subr.bf16.mxu0 0
    %410 = vmatpush1.bf16.msra.mxu0 0
    %411 = vmatprep.subr.bf16.mxu0 0
    %412 = vmatpush1.bf16.msra.mxu0 0
    %413 = vmatprep.subr.bf16.mxu0 0
    %414 = vmatpush1.bf16.msra.mxu0 0
    %415 = vmatprep.subr.bf16.mxu0 0
    %416 = vmatpush1.bf16.msra.mxu0 0
    %417 = vmatprep.mubr.bf16.mxu0 0
    %418 = vmatmul.mubr.bf16.gmra.mrb[0].mxu0 %v380
    %v419 = vpop.f32.mrb[0].mxu0
    %v420 = vadd.f32 0.0, %v419
    %v421 = vpop.f32.mrb[0].mxu0
    %v422 = vpop.f32.mrb[0].mxu0
    %v423 = vadd.f32 0.0, %v422
    %v424 = vpop.f32.mrb[0].mxu0
    %425 = vmatprep.mubr.bf16.mxu0 0
    %426 = vmatmul.mubr.bf16.gmra.mrb[0].mxu0 %v383
    %v427 = vpop.f32.mrb[0].mxu0
    %v428 = vadd.f32 0.0, %v427
    %v429 = vpop.f32.mrb[0].mxu0
    %v430 = vpop.f32.mrb[0].mxu0
    %v431 = vadd.f32 0.0, %v430
    %v432 = vpop.f32.mrb[0].mxu0
    %433 = vdwg.mxu0
    %v438 = vunpack.c.l.b16 %v352
    %v439 = vunpack.c.l.b16 %v353
    %v440 = vunpack.c.l.b16 %v354
    %v441 = vunpack.c.l.b16 %v355
    %v442 = vpack.c.b16 %v439, %v438
    %v443 = vpack.c.b16 %v441, %v440
    %v447 = vsel %vm72, %v350, 0
    %v450 = vsel %vm72, %v351, 0
    %452 = vmatprep.subr.bf16.mxu0 0
    %453 = vmatpush1.bf16.msra.mxu0 %v442
    %454 = vmatprep.subr.bf16.mxu0 0
    %455 = vmatpush1.bf16.msra.mxu0 %v443
    %456 = vmatprep.subr.bf16.mxu0 0
    %457 = vmatpush1.bf16.msra.mxu0 0
    %458 = vmatprep.subr.bf16.mxu0 0
    %459 = vmatpush1.bf16.msra.mxu0 0
    %460 = vmatprep.subr.bf16.mxu0 0
    %461 = vmatpush1.bf16.msra.mxu0 0
    %462 = vmatprep.subr.bf16.mxu0 0
    %463 = vmatpush1.bf16.msra.mxu0 0
    %464 = vmatprep.subr.bf16.mxu0 0
    %465 = vmatpush1.bf16.msra.mxu0 0
    %466 = vmatprep.subr.bf16.mxu0 0
    %467 = vmatpush1.bf16.msra.mxu0 0
    %468 = vmatprep.subr.bf16.mxu0 0
    %469 = vmatpush1.bf16.msra.mxu0 0
    %470 = vmatprep.subr.bf16.mxu0 0
    %471 = vmatpush1.bf16.msra.mxu0 0
    %472 = vmatprep.subr.bf16.mxu0 0
    %473 = vmatpush1.bf16.msra.mxu0 0
    %474 = vmatprep.subr.bf16.mxu0 0
    %475 = vmatpush1.bf16.msra.mxu0 0
    %476 = vmatprep.subr.bf16.mxu0 0
    %477 = vmatpush1.bf16.msra.mxu0 0
    %478 = vmatprep.subr.bf16.mxu0 0
    %479 = vmatpush1.bf16.msra.mxu0 0
    %480 = vmatprep.subr.bf16.mxu0 0
    %481 = vmatpush1.bf16.msra.mxu0 0
    %482 = vmatprep.subr.bf16.mxu0 0
    %483 = vmatpush1.bf16.msra.mxu0 0
    %484 = vmatprep.mubr.bf16.mxu0 0
    %485 = vmatmul.mubr.bf16.gmra.mrb[0].mxu0 %v447
    %v486 = vpop.f32.mrb[0].mxu0
    %v487 = vadd.f32 %v420, %v486
    %v488 = vpop.f32.mrb[0].mxu0
    %v489 = vpop.f32.mrb[0].mxu0
    %v490 = vadd.f32 %v423, %v489
    %v491 = vpop.f32.mrb[0].mxu0
    %492 = vmatprep.mubr.bf16.mxu0 0
    %493 = vmatmul.mubr.bf16.gmra.mrb[0].mxu0 %v450
    %v494 = vpop.f32.mrb[0].mxu0
    %v495 = vadd.f32 %v428, %v494
    %v496 = vpop.f32.mrb[0].mxu0
    %v497 = vpop.f32.mrb[0].mxu0
    %v498 = vadd.f32 %v431, %v497
    %v499 = vpop.f32.mrb[0].mxu0
    %500 = vdwg.mxu0
    %v501 = vld [vmem:[#allocation3 + $0x9] sm:$0xff]
    %v502 = vld [vmem:[#allocation3 + $0x11] sm:$0xff]
    %v503 = vld [vmem:[#allocation3 + $0x29] sm:$0xff]
    %v504 = vld [vmem:[#allocation3 + $0x31] sm:$0xff]
    %v505 = vpack.c.bf16 %v502, %v501
    %v506 = vpack.c.bf16 %v504, %v503
    %s507 = scalar_lea.vmem [#allocation9], 32
    %v508 = vld [vmem:[%s507] sm:$0xf]
    %v509 = vld [vmem:[%s507 + $0x4] sm:$0xf]
    %v510 = vld [vmem:[%s507 + $0x8] sm:$0xf]
    %v511 = vld [vmem:[%s507 + $0xc] sm:$0xf]
    %v516 = vunpack.c.l.b16 %v508
    %v517 = vunpack.c.l.b16 %v509
    %v518 = vunpack.c.l.b16 %v510
    %v519 = vunpack.c.l.b16 %v511
    %v520 = vpack.c.b16 %v517, %v516
    %v521 = vpack.c.b16 %v519, %v518
    %v525 = vsel %vm72, %v505, 0
    %v528 = vsel %vm72, %v506, 0
    %530 = vmatprep.subr.bf16.mxu0 0
    %531 = vmatpush1.bf16.msra.mxu0 %v520
    %532 = vmatprep.subr.bf16.mxu0 0
    %533 = vmatpush1.bf16.msra.mxu0 %v521
    %534 = vmatprep.subr.bf16.mxu0 0
    %535 = vmatpush1.bf16.msra.mxu0 0
    %536 = vmatprep.subr.bf16.mxu0 0
    %537 = vmatpush1.bf16.msra.mxu0 0
    %538 = vmatprep.subr.bf16.mxu0 0
    %539 = vmatpush1.bf16.msra.mxu0 0
    %540 = vmatprep.subr.bf16.mxu0 0
    %541 = vmatpush1.bf16.msra.mxu0 0
    %542 = vmatprep.subr.bf16.mxu0 0
    %543 = vmatpush1.bf16.msra.mxu0 0
    %544 = vmatprep.subr.bf16.mxu0 0
    %545 = vmatpush1.bf16.msra.mxu0 0
    %546 = vmatprep.subr.bf16.mxu0 0
    %547 = vmatpush1.bf16.msra.mxu0 0
    %548 = vmatprep.subr.bf16.mxu0 0
    %549 = vmatpush1.bf16.msra.mxu0 0
    %550 = vmatprep.subr.bf16.mxu0 0
    %551 = vmatpush1.bf16.msra.mxu0 0
    %552 = vmatprep.subr.bf16.mxu0 0
    %553 = vmatpush1.bf16.msra.mxu0 0
    %554 = vmatprep.subr.bf16.mxu0 0
    %555 = vmatpush1.bf16.msra.mxu0 0
    %556 = vmatprep.subr.bf16.mxu0 0
    %557 = vmatpush1.bf16.msra.mxu0 0
    %558 = vmatprep.subr.bf16.mxu0 0
    %559 = vmatpush1.bf16.msra.mxu0 0
    %560 = vmatprep.subr.bf16.mxu0 0
    %561 = vmatpush1.bf16.msra.mxu0 0
    %562 = vmatprep.mubr.bf16.mxu0 0
    %563 = vmatmul.mubr.bf16.gmra.mrb[0].mxu0 %v525
    %v564 = vpop.f32.mrb[0].mxu0
    %v565 = vadd.f32 0.0, %v564
    %v566 = vpop.f32.mrb[0].mxu0
    %v567 = vpop.f32.mrb[0].mxu0
    %v568 = vadd.f32 0.0, %v567
    %v569 = vpop.f32.mrb[0].mxu0
    %570 = vmatprep.mubr.bf16.mxu0 0
    %571 = vmatmul.mubr.bf16.gmra.mrb[0].mxu0 %v528
    %v572 = vpop.f32.mrb[0].mxu0
    %v573 = vadd.f32 0.0, %v572
    %v574 = vpop.f32.mrb[0].mxu0
    %v575 = vpop.f32.mrb[0].mxu0
    %v576 = vadd.f32 0.0, %v575
    %v577 = vpop.f32.mrb[0].mxu0
    %578 = vdwg.mxu0
    %v579 = vadd.f32 %v487, %v565
    %v580 = vadd.f32 %v490, %v568
    %v581 = vadd.f32 %v495, %v573
    %v582 = vadd.f32 %v498, %v576
    %v584 = vlaneseq
    %v585 = vshrl.u32 %v584, 7
    %v586 = vsub.s32 0, %v585
    %v587 = vrot.slane %v345, %v586
    %v589 = vadd.f32 %v579, %v587
    %v590 = vadd.f32 %v580, %v587
    %v591 = vadd.f32 %v581, %v587
    %v592 = vadd.f32 %v582, %v587
    %v593 = vmax.f32 %v589, 0.0
    %v594 = vmax.f32 %v590, 0.0
    %v595 = vmax.f32 %v591, 0.0
    %v596 = vmax.f32 %v592, 0.0
    %597 = vst.msk [vmem:[#allocation2 + $0x8] sm:$0xff] %vm72, %v593
    %598 = vst.msk [vmem:[#allocation2 + $0x10] sm:$0xff] %vm72, %v594
    %599 = vst.msk [vmem:[#allocation2 + $0x28] sm:$0xff] %vm72, %v595
    %600 = vst.msk [vmem:[#allocation2 + $0x30] sm:$0xff] %vm72, %v596
    %s601 = scalar_lea.vmem %s5, 1
    %v602 = vld [vmem:[%s601] sm:$0x1]
    %v603 = vld [vmem:[#allocation2 + $0x6] sm:$0xff]
    %v604 = vld [vmem:[#allocation2 + $0xe] sm:$0xff]
    %v605 = vld [vmem:[#allocation2 + $0x26] sm:$0xff]
    %v606 = vld [vmem:[#allocation2 + $0x2e] sm:$0xff]
    %v607 = vpack.c.bf16 %v604, %v603
    %v608 = vpack.c.bf16 %v606, %v605
    %s609 = scalar_lea.vmem [#allocation9], 48
    %v610 = vld [vmem:[%s609] sm:$0xf]
    %v611 = vld [vmem:[%s609 + $0x4] sm:$0xf]
    %v612 = vld [vmem:[%s609 + $0x8] sm:$0xf]
    %v613 = vld [vmem:[%s609 + $0xc] sm:$0xf]
    %v614 = vld [vmem:[#allocation2 + $0x8] sm:$0xff]
    %v615 = vld [vmem:[#allocation2 + $0x10] sm:$0xff]
    %v616 = vld [vmem:[#allocation2 + $0x28] sm:$0xff]
    %v617 = vld [vmem:[#allocation2 + $0x30] sm:$0xff]
    %v618 = vpack.c.bf16 %v615, %v614
    %v619 = vpack.c.bf16 %v617, %v616
    %s620 = scalar_lea.vmem [#allocation9], 64
    %v621 = vld [vmem:[%s620] sm:$0xf]
    %v622 = vld [vmem:[%s620 + $0x4] sm:$0xf]
    %v623 = vld [vmem:[%s620 + $0x8] sm:$0xf]
    %v624 = vld [vmem:[%s620 + $0xc] sm:$0xf]
    %v629 = vunpack.c.l.b16 %v621
    %v630 = vunpack.c.l.b16 %v622
    %v631 = vunpack.c.l.b16 %v623
    %v632 = vunpack.c.l.b16 %v624
    %v633 = vpack.c.b16 %v630, %v629
    %v634 = vpack.c.b16 %v632, %v631
    %v638 = vsel %vm72, %v618, 0
    %v641 = vsel %vm72, %v619, 0
    %643 = vmatprep.subr.bf16.mxu0 0
    %644 = vmatpush1.bf16.msra.mxu0 %v633
    %645 = vmatprep.subr.bf16.mxu0 0
    %646 = vmatpush1.bf16.msra.mxu0 %v634
    %647 = vmatprep.subr.bf16.mxu0 0
    %648 = vmatpush1.bf16.msra.mxu0 0
    %649 = vmatprep.subr.bf16.mxu0 0
    %650 = vmatpush1.bf16.msra.mxu0 0
    %651 = vmatprep.subr.bf16.mxu0 0
    %652 = vmatpush1.bf16.msra.mxu0 0
    %653 = vmatprep.subr.bf16.mxu0 0
    %654 = vmatpush1.bf16.msra.mxu0 0
    %655 = vmatprep.subr.bf16.mxu0 0
    %656 = vmatpush1.bf16.msra.mxu0 0
    %657 = vmatprep.subr.bf16.mxu0 0
    %658 = vmatpush1.bf16.msra.mxu0 0
    %659 = vmatprep.subr.bf16.mxu0 0
    %660 = vmatpush1.bf16.msra.mxu0 0
    %661 = vmatprep.subr.bf16.mxu0 0
    %662 = vmatpush1.bf16.msra.mxu0 0
    %663 = vmatprep.subr.bf16.mxu0 0
    %664 = vmatpush1.bf16.msra.mxu0 0
    %665 = vmatprep.subr.bf16.mxu0 0
    %666 = vmatpush1.bf16.msra.mxu0 0
    %667 = vmatprep.subr.bf16.mxu0 0
    %668 = vmatpush1.bf16.msra.mxu0 0
    %669 = vmatprep.subr.bf16.mxu0 0
    %670 = vmatpush1.bf16.msra.mxu0 0
    %671 = vmatprep.subr.bf16.mxu0 0
    %672 = vmatpush1.bf16.msra.mxu0 0
    %673 = vmatprep.subr.bf16.mxu0 0
    %674 = vmatpush1.bf16.msra.mxu0 0
    %675 = vmatprep.mubr.bf16.mxu0 0
    %676 = vmatmul.mubr.bf16.gmra.mrb[0].mxu0 %v638
    %v677 = vpop.f32.mrb[0].mxu0
    %v678 = vadd.f32 0.0, %v677
    %v679 = vpop.f32.mrb[0].mxu0
    %v680 = vpop.f32.mrb[0].mxu0
    %v681 = vadd.f32 0.0, %v680
    %v682 = vpop.f32.mrb[0].mxu0
    %683 = vmatprep.mubr.bf16.mxu0 0
    %684 = vmatmul.mubr.bf16.gmra.mrb[0].mxu0 %v641
    %v685 = vpop.f32.mrb[0].mxu0
    %v686 = vadd.f32 0.0, %v685
    %v687 = vpop.f32.mrb[0].mxu0
    %v688 = vpop.f32.mrb[0].mxu0
    %v689 = vadd.f32 0.0, %v688
    %v690 = vpop.f32.mrb[0].mxu0
    %691 = vdwg.mxu0
    %v696 = vunpack.c.l.b16 %v610
    %v697 = vunpack.c.l.b16 %v611
    %v698 = vunpack.c.l.b16 %v612
    %v699 = vunpack.c.l.b16 %v613
    %v700 = vpack.c.b16 %v697, %v696
    %v701 = vpack.c.b16 %v699, %v698
    %v705 = vsel %vm72, %v607, 0
    %v708 = vsel %vm72, %v608, 0
    %710 = vmatprep.subr.bf16.mxu0 0
    %711 = vmatpush1.bf16.msra.mxu0 %v700
    %712 = vmatprep.subr.bf16.mxu0 0
    %713 = vmatpush1.bf16.msra.mxu0 %v701
    %714 = vmatprep.subr.bf16.mxu0 0
    %715 = vmatpush1.bf16.msra.mxu0 0
    %716 = vmatprep.subr.bf16.mxu0 0
    %717 = vmatpush1.bf16.msra.mxu0 0
    %718 = vmatprep.subr.bf16.mxu0 0
    %719 = vmatpush1.bf16.msra.mxu0 0
    %720 = vmatprep.subr.bf16.mxu0 0
    %721 = vmatpush1.bf16.msra.mxu0 0
    %722 = vmatprep.subr.bf16.mxu0 0
    %723 = vmatpush1.bf16.msra.mxu0 0
    %724 = vmatprep.subr.bf16.mxu0 0
    %725 = vmatpush1.bf16.msra.mxu0 0
    %726 = vmatprep.subr.bf16.mxu0 0
    %727 = vmatpush1.bf16.msra.mxu0 0
    %728 = vmatprep.subr.bf16.mxu0 0
    %729 = vmatpush1.bf16.msra.mxu0 0
    %730 = vmatprep.subr.bf16.mxu0 0
    %731 = vmatpush1.bf16.msra.mxu0 0
    %732 = vmatprep.subr.bf16.mxu0 0
    %733 = vmatpush1.bf16.msra.mxu0 0
    %734 = vmatprep.subr.bf16.mxu0 0
    %735 = vmatpush1.bf16.msra.mxu0 0
    %736 = vmatprep.subr.bf16.mxu0 0
    %737 = vmatpush1.bf16.msra.mxu0 0
    %738 = vmatprep.subr.bf16.mxu0 0
    %739 = vmatpush1.bf16.msra.mxu0 0
    %740 = vmatprep.subr.bf16.mxu0 0
    %741 = vmatpush1.bf16.msra.mxu0 0
    %742 = vmatprep.mubr.bf16.mxu0 0
    %743 = vmatmul.mubr.bf16.gmra.mrb[0].mxu0 %v705
    %v744 = vpop.f32.mrb[0].mxu0
    %v745 = vadd.f32 %v678, %v744
    %v746 = vpop.f32.mrb[0].mxu0
    %v747 = vpop.f32.mrb[0].mxu0
    %v748 = vadd.f32 %v681, %v747
    %v749 = vpop.f32.mrb[0].mxu0
    %750 = vmatprep.mubr.bf16.mxu0 0
    %751 = vmatmul.mubr.bf16.gmra.mrb[0].mxu0 %v708
    %v752 = vpop.f32.mrb[0].mxu0
    %v753 = vadd.f32 %v686, %v752
    %v754 = vpop.f32.mrb[0].mxu0
    %v755 = vpop.f32.mrb[0].mxu0
    %v756 = vadd.f32 %v689, %v755
    %v757 = vpop.f32.mrb[0].mxu0
    %758 = vdwg.mxu0
    %v759 = vld [vmem:[#allocation2 + $0xa] sm:$0xff]
    %v760 = vld [vmem:[#allocation2 + $0x12] sm:$0xff]
    %v761 = vld [vmem:[#allocation2 + $0x2a] sm:$0xff]
    %v762 = vld [vmem:[#allocation2 + $0x32] sm:$0xff]
    %v763 = vpack.c.bf16 %v760, %v759
    %v764 = vpack.c.bf16 %v762, %v761
    %s765 = scalar_lea.vmem [#allocation9], 80
    %v766 = vld [vmem:[%s765] sm:$0xf]
    %v767 = vld [vmem:[%s765 + $0x4] sm:$0xf]
    %v768 = vld [vmem:[%s765 + $0x8] sm:$0xf]
    %v769 = vld [vmem:[%s765 + $0xc] sm:$0xf]
    %v774 = vunpack.c.l.b16 %v766
    %v775 = vunpack.c.l.b16 %v767
    %v776 = vunpack.c.l.b16 %v768
    %v777 = vunpack.c.l.b16 %v769
    %v778 = vpack.c.b16 %v775, %v774
    %v779 = vpack.c.b16 %v777, %v776
    %v783 = vsel %vm72, %v763, 0
    %v786 = vsel %vm72, %v764, 0
    %788 = vmatprep.subr.bf16.mxu0 0
    %789 = vmatpush1.bf16.msra.mxu0 %v778
    %790 = vmatprep.subr.bf16.mxu0 0
    %791 = vmatpush1.bf16.msra.mxu0 %v779
    %792 = vmatprep.subr.bf16.mxu0 0
    %793 = vmatpush1.bf16.msra.mxu0 0
    %794 = vmatprep.subr.bf16.mxu0 0
    %795 = vmatpush1.bf16.msra.mxu0 0
    %796 = vmatprep.subr.bf16.mxu0 0
    %797 = vmatpush1.bf16.msra.mxu0 0
    %798 = vmatprep.subr.bf16.mxu0 0
    %799 = vmatpush1.bf16.msra.mxu0 0
    %800 = vmatprep.subr.bf16.mxu0 0
    %801 = vmatpush1.bf16.msra.mxu0 0
    %802 = vmatprep.subr.bf16.mxu0 0
    %803 = vmatpush1.bf16.msra.mxu0 0
    %804 = vmatprep.subr.bf16.mxu0 0
    %805 = vmatpush1.bf16.msra.mxu0 0
    %806 = vmatprep.subr.bf16.mxu0 0
    %807 = vmatpush1.bf16.msra.mxu0 0
    %808 = vmatprep.subr.bf16.mxu0 0
    %809 = vmatpush1.bf16.msra.mxu0 0
    %810 = vmatprep.subr.bf16.mxu0 0
    %811 = vmatpush1.bf16.msra.mxu0 0
    %812 = vmatprep.subr.bf16.mxu0 0
    %813 = vmatpush1.bf16.msra.mxu0 0
    %814 = vmatprep.subr.bf16.mxu0 0
    %815 = vmatpush1.bf16.msra.mxu0 0
    %816 = vmatprep.subr.bf16.mxu0 0
    %817 = vmatpush1.bf16.msra.mxu0 0
    %818 = vmatprep.subr.bf16.mxu0 0
    %819 = vmatpush1.bf16.msra.mxu0 0
    %820 = vmatprep.mubr.bf16.mxu0 0
    %821 = vmatmul.mubr.bf16.gmra.mrb[0].mxu0 %v783
    %v822 = vpop.f32.mrb[0].mxu0
    %v823 = vadd.f32 0.0, %v822
    %v824 = vpop.f32.mrb[0].mxu0
    %v825 = vpop.f32.mrb[0].mxu0
    %v826 = vadd.f32 0.0, %v825
    %v827 = vpop.f32.mrb[0].mxu0
    %828 = vmatprep.mubr.bf16.mxu0 0
    %829 = vmatmul.mubr.bf16.gmra.mrb[0].mxu0 %v786
    %v830 = vpop.f32.mrb[0].mxu0
    %v831 = vadd.f32 0.0, %v830
    %v832 = vpop.f32.mrb[0].mxu0
    %v833 = vpop.f32.mrb[0].mxu0
    %v834 = vadd.f32 0.0, %v833
    %v835 = vpop.f32.mrb[0].mxu0
    %836 = vdwg.mxu0
    %v837 = vadd.f32 %v745, %v823
    %v838 = vadd.f32 %v748, %v826
    %v839 = vadd.f32 %v753, %v831
    %v840 = vadd.f32 %v756, %v834
    %v842 = vlaneseq
    %v843 = vshrl.u32 %v842, 7
    %v844 = vsub.s32 0, %v843
    %v845 = vrot.slane %v602, %v844
    %v847 = vadd.f32 %v837, %v845
    %v848 = vadd.f32 %v838, %v845
    %v849 = vadd.f32 %v839, %v845
    %v850 = vadd.f32 %v840, %v845
    %v851 = vmax.f32 %v847, 0.0
    %v852 = vmax.f32 %v848, 0.0
    %v853 = vmax.f32 %v849, 0.0
    %v854 = vmax.f32 %v850, 0.0
    %855 = vst.msk [vmem:[#allocation3 + $0x8] sm:$0xff] %vm72, %v851
    %856 = vst.msk [vmem:[#allocation3 + $0x10] sm:$0xff] %vm72, %v852
    %857 = vst.msk [vmem:[#allocation3 + $0x28] sm:$0xff] %vm72, %v853
    %858 = vst.msk [vmem:[#allocation3 + $0x30] sm:$0xff] %vm72, %v854
    %s859 = scalar_lea.vmem %s5, 2
    %v860 = vld [vmem:[%s859] sm:$0x1]
    %v861 = vld [vmem:[#allocation3 + $0x7] sm:$0xff]
    %v862 = vld [vmem:[#allocation3 + $0xf] sm:$0xff]
    %v863 = vld [vmem:[#allocation3 + $0x27] sm:$0xff]
    %v864 = vld [vmem:[#allocation3 + $0x2f] sm:$0xff]
    %v865 = vpack.c.bf16 %v862, %v861
    %v866 = vpack.c.bf16 %v864, %v863
    %s867 = scalar_lea.vmem [#allocation9], 96
    %v868 = vld [vmem:[%s867] sm:$0xf]
    %v869 = vld [vmem:[%s867 + $0x4] sm:$0xf]
    %v870 = vld [vmem:[%s867 + $0x8] sm:$0xf]
    %v871 = vld [vmem:[%s867 + $0xc] sm:$0xf]
    %v872 = vld [vmem:[#allocation3 + $0x8] sm:$0xff]
    %v873 = vld [vmem:[#allocation3 + $0x10] sm:$0xff]
    %v874 = vld [vmem:[#allocation3 + $0x28] sm:$0xff]
    %v875 = vld [vmem:[#allocation3 + $0x30] sm:$0xff]
    %v876 = vpack.c.bf16 %v873, %v872
    %v877 = vpack.c.bf16 %v875, %v874
    %s878 = scalar_lea.vmem [#allocation9], 112
    %v879 = vld [vmem:[%s878] sm:$0xf]
    %v880 = vld [vmem:[%s878 + $0x4] sm:$0xf]
    %v881 = vld [vmem:[%s878 + $0x8] sm:$0xf]
    %v882 = vld [vmem:[%s878 + $0xc] sm:$0xf]
    %v887 = vunpack.c.l.b16 %v879
    %v888 = vunpack.c.l.b16 %v880
    %v889 = vunpack.c.l.b16 %v881
    %v890 = vunpack.c.l.b16 %v882
    %v891 = vpack.c.b16 %v888, %v887
    %v892 = vpack.c.b16 %v890, %v889
    %v896 = vsel %vm72, %v876, 0
    %v899 = vsel %vm72, %v877, 0
    %901 = vmatprep.subr.bf16.mxu0 0
    %902 = vmatpush1.bf16.msra.mxu0 %v891
    %903 = vmatprep.subr.bf16.mxu0 0
    %904 = vmatpush1.bf16.msra.mxu0 %v892
    %905 = vmatprep.subr.bf16.mxu0 0
    %906 = vmatpush1.bf16.msra.mxu0 0
    %907 = vmatprep.subr.bf16.mxu0 0
    %908 = vmatpush1.bf16.msra.mxu0 0
    %909 = vmatprep.subr.bf16.mxu0 0
    %910 = vmatpush1.bf16.msra.mxu0 0
    %911 = vmatprep.subr.bf16.mxu0 0
    %912 = vmatpush1.bf16.msra.mxu0 0
    %913 = vmatprep.subr.bf16.mxu0 0
    %914 = vmatpush1.bf16.msra.mxu0 0
    %915 = vmatprep.subr.bf16.mxu0 0
    %916 = vmatpush1.bf16.msra.mxu0 0
    %917 = vmatprep.subr.bf16.mxu0 0
    %918 = vmatpush1.bf16.msra.mxu0 0
    %919 = vmatprep.subr.bf16.mxu0 0
    %920 = vmatpush1.bf16.msra.mxu0 0
    %921 = vmatprep.subr.bf16.mxu0 0
    %922 = vmatpush1.bf16.msra.mxu0 0
    %923 = vmatprep.subr.bf16.mxu0 0
    %924 = vmatpush1.bf16.msra.mxu0 0
    %925 = vmatprep.subr.bf16.mxu0 0
    %926 = vmatpush1.bf16.msra.mxu0 0
    %927 = vmatprep.subr.bf16.mxu0 0
    %928 = vmatpush1.bf16.msra.mxu0 0
    %929 = vmatprep.subr.bf16.mxu0 0
    %930 = vmatpush1.bf16.msra.mxu0 0
    %931 = vmatprep.subr.bf16.mxu0 0
    %932 = vmatpush1.bf16.msra.mxu0 0
    %933 = vmatprep.mubr.bf16.mxu0 0
    %934 = vmatmul.mubr.bf16.gmra.mrb[0].mxu0 %v896
    %v935 = vpop.f32.mrb[0].mxu0
    %v936 = vadd.f32 0.0, %v935
    %v937 = vpop.f32.mrb[0].mxu0
    %v938 = vpop.f32.mrb[0].mxu0
    %v939 = vadd.f32 0.0, %v938
    %v940 = vpop.f32.mrb[0].mxu0
    %941 = vmatprep.mubr.bf16.mxu0 0
    %942 = vmatmul.mubr.bf16.gmra.mrb[0].mxu0 %v899
    %v943 = vpop.f32.mrb[0].mxu0
    %v944 = vadd.f32 0.0, %v943
    %v945 = vpop.f32.mrb[0].mxu0
    %v946 = vpop.f32.mrb[0].mxu0
    %v947 = vadd.f32 0.0, %v946
    %v948 = vpop.f32.mrb[0].mxu0
    %949 = vdwg.mxu0
    %v954 = vunpack.c.l.b16 %v868
    %v955 = vunpack.c.l.b16 %v869
    %v956 = vunpack.c.l.b16 %v870
    %v957 = vunpack.c.l.b16 %v871
    %v958 = vpack.c.b16 %v955, %v954
    %v959 = vpack.c.b16 %v957, %v956
    %v963 = vsel %vm72, %v865, 0
    %v966 = vsel %vm72, %v866, 0
    %968 = vmatprep.subr.bf16.mxu0 0
    %969 = vmatpush1.bf16.msra.mxu0 %v958
    %970 = vmatprep.subr.bf16.mxu0 0
    %971 = vmatpush1.bf16.msra.mxu0 %v959
    %972 = vmatprep.subr.bf16.mxu0 0
    %973 = vmatpush1.bf16.msra.mxu0 0
    %974 = vmatprep.subr.bf16.mxu0 0
    %975 = vmatpush1.bf16.msra.mxu0 0
    %976 = vmatprep.subr.bf16.mxu0 0
    %977 = vmatpush1.bf16.msra.mxu0 0
    %978 = vmatprep.subr.bf16.mxu0 0
    %979 = vmatpush1.bf16.msra.mxu0 0
    %980 = vmatprep.subr.bf16.mxu0 0
    %981 = vmatpush1.bf16.msra.mxu0 0
    %982 = vmatprep.subr.bf16.mxu0 0
    %983 = vmatpush1.bf16.msra.mxu0 0
    %984 = vmatprep.subr.bf16.mxu0 0
    %985 = vmatpush1.bf16.msra.mxu0 0
    %986 = vmatprep.subr.bf16.mxu0 0
    %987 = vmatpush1.bf16.msra.mxu0 0
    %988 = vmatprep.subr.bf16.mxu0 0
    %989 = vmatpush1.bf16.msra.mxu0 0
    %990 = vmatprep.subr.bf16.mxu0 0
    %991 = vmatpush1.bf16.msra.mxu0 0
    %992 = vmatprep.subr.bf16.mxu0 0
    %993 = vmatpush1.bf16.msra.mxu0 0
    %994 = vmatprep.subr.bf16.mxu0 0
    %995 = vmatpush1.bf16.msra.mxu0 0
    %996 = vmatprep.subr.bf16.mxu0 0
    %997 = vmatpush1.bf16.msra.mxu0 0
    %998 = vmatprep.subr.bf16.mxu0 0
    %999 = vmatpush1.bf16.msra.mxu0 0
    %1000 = vmatprep.mubr.bf16.mxu0 0
    %1001 = vmatmul.mubr.bf16.gmra.mrb[0].mxu0 %v963
    %v1002 = vpop.f32.mrb[0].mxu0
    %v1003 = vadd.f32 %v936, %v1002
    %v1004 = vpop.f32.mrb[0].mxu0
    %v1005 = vpop.f32.mrb[0].mxu0
    %v1006 = vadd.f32 %v939, %v1005
    %v1007 = vpop.f32.mrb[0].mxu0
    %1008 = vmatprep.mubr.bf16.mxu0 0
    %1009 = vmatmul.mubr.bf16.gmra.mrb[0].mxu0 %v966
    %v1010 = vpop.f32.mrb[0].mxu0
    %v1011 = vadd.f32 %v944, %v1010
    %v1012 = vpop.f32.mrb[0].mxu0
    %v1013 = vpop.f32.mrb[0].mxu0
    %v1014 = vadd.f32 %v947, %v1013
    %v1015 = vpop.f32.mrb[0].mxu0
    %1016 = vdwg.mxu0
    %v1017 = vld [vmem:[#allocation3 + $0x9] sm:$0xff]
    %v1018 = vld [vmem:[#allocation3 + $0x11] sm:$0xff]
    %v1019 = vld [vmem:[#allocation3 + $0x29] sm:$0xff]
    %v1020 = vld [vmem:[#allocation3 + $0x31] sm:$0xff]
    %v1021 = vpack.c.bf16 %v1018, %v1017
    %v1022 = vpack.c.bf16 %v1020, %v1019
    %s1023 = scalar_lea.vmem [#allocation9], 128
    %v1024 = vld [vmem:[%s1023] sm:$0xf]
    %v1025 = vld [vmem:[%s1023 + $0x4] sm:$0xf]
    %v1026 = vld [vmem:[%s1023 + $0x8] sm:$0xf]
    %v1027 = vld [vmem:[%s1023 + $0xc] sm:$0xf]
    %v1032 = vunpack.c.l.b16 %v1024
    %v1033 = vunpack.c.l.b16 %v1025
    %v1034 = vunpack.c.l.b16 %v1026
    %v1035 = vunpack.c.l.b16 %v1027
    %v1036 = vpack.c.b16 %v1033, %v1032
    %v1037 = vpack.c.b16 %v1035, %v1034
    %v1041 = vsel %vm72, %v1021, 0
    %v1044 = vsel %vm72, %v1022, 0
    %1046 = vmatprep.subr.bf16.mxu0 0
    %1047 = vmatpush1.bf16.msra.mxu0 %v1036
    %1048 = vmatprep.subr.bf16.mxu0 0
    %1049 = vmatpush1.bf16.msra.mxu0 %v1037
    %1050 = vmatprep.subr.bf16.mxu0 0
    %1051 = vmatpush1.bf16.msra.mxu0 0
    %1052 = vmatprep.subr.bf16.mxu0 0
    %1053 = vmatpush1.bf16.msra.mxu0 0
    %1054 = vmatprep.subr.bf16.mxu0 0
    %1055 = vmatpush1.bf16.msra.mxu0 0
    %1056 = vmatprep.subr.bf16.mxu0 0
    %1057 = vmatpush1.bf16.msra.mxu0 0
    %1058 = vmatprep.subr.bf16.mxu0 0
    %1059 = vmatpush1.bf16.msra.mxu0 0
    %1060 = vmatprep.subr.bf16.mxu0 0
    %1061 = vmatpush1.bf16.msra.mxu0 0
    %1062 = vmatprep.subr.bf16.mxu0 0
    %1063 = vmatpush1.bf16.msra.mxu0 0
    %1064 = vmatprep.subr.bf16.mxu0 0
    %1065 = vmatpush1.bf16.msra.mxu0 0
    %1066 = vmatprep.subr.bf16.mxu0 0
    %1067 = vmatpush1.bf16.msra.mxu0 0
    %1068 = vmatprep.subr.bf16.mxu0 0
    %1069 = vmatpush1.bf16.msra.mxu0 0
    %1070 = vmatprep.subr.bf16.mxu0 0
    %1071 = vmatpush1.bf16.msra.mxu0 0
    %1072 = vmatprep.subr.bf16.mxu0 0
    %1073 = vmatpush1.bf16.msra.mxu0 0
    %1074 = vmatprep.subr.bf16.mxu0 0
    %1075 = vmatpush1.bf16.msra.mxu0 0
    %1076 = vmatprep.subr.bf16.mxu0 0
    %1077 = vmatpush1.bf16.msra.mxu0 0
    %1078 = vmatprep.mubr.bf16.mxu0 0
    %1079 = vmatmul.mubr.bf16.gmra.mrb[0].mxu0 %v1041
    %v1080 = vpop.f32.mrb[0].mxu0
    %v1081 = vadd.f32 0.0, %v1080
    %v1082 = vpop.f32.mrb[0].mxu0
    %v1083 = vpop.f32.mrb[0].mxu0
    %v1084 = vadd.f32 0.0, %v1083
    %v1085 = vpop.f32.mrb[0].mxu0
    %1086 = vmatprep.mubr.bf16.mxu0 0
    %1087 = vmatmul.mubr.bf16.gmra.mrb[0].mxu0 %v1044
    %v1088 = vpop.f32.mrb[0].mxu0
    %v1089 = vadd.f32 0.0, %v1088
    %v1090 = vpop.f32.mrb[0].mxu0
    %v1091 = vpop.f32.mrb[0].mxu0
    %v1092 = vadd.f32 0.0, %v1091
    %v1093 = vpop.f32.mrb[0].mxu0
    %1094 = vdwg.mxu0
    %v1095 = vadd.f32 %v1003, %v1081
    %v1096 = vadd.f32 %v1006, %v1084
    %v1097 = vadd.f32 %v1011, %v1089
    %v1098 = vadd.f32 %v1014, %v1092
    %v1100 = vlaneseq
    %v1101 = vshrl.u32 %v1100, 7
    %v1102 = vsub.s32 0, %v1101
    %v1103 = vrot.slane %v860, %v1102
    %v1105 = vadd.f32 %v1095, %v1103
    %v1106 = vadd.f32 %v1096, %v1103
    %v1107 = vadd.f32 %v1097, %v1103
    %v1108 = vadd.f32 %v1098, %v1103
    %v1109 = vmax.f32 %v1105, 0.0
    %v1110 = vmax.f32 %v1106, 0.0
    %v1111 = vmax.f32 %v1107, 0.0
    %v1112 = vmax.f32 %v1108, 0.0
    %1113 = vst.msk [vmem:[#allocation2 + $0x8] sm:$0xff] %vm72, %v1109
    %1114 = vst.msk [vmem:[#allocation2 + $0x10] sm:$0xff] %vm72, %v1110
    %1115 = vst.msk [vmem:[#allocation2 + $0x28] sm:$0xff] %vm72, %v1111
    %1116 = vst.msk [vmem:[#allocation2 + $0x30] sm:$0xff] %vm72, %v1112
    %v1117 = vld [vmem:[%s5] sm:$0x1]
    %v1118 = vld [vmem:[#allocation2 + $0x7] sm:$0xff]
    %v1119 = vld [vmem:[#allocation2 + $0xf] sm:$0xff]
    %v1120 = vld [vmem:[#allocation2 + $0x27] sm:$0xff]
    %v1121 = vld [vmem:[#allocation2 + $0x2f] sm:$0xff]
    %v1122 = vpack.c.bf16 %v1119, %v1118
    %v1123 = vpack.c.bf16 %v1121, %v1120
    %v1124 = vld [vmem:[#allocation9] sm:$0xf]
    %v1125 = vld [vmem:[#allocation9 + $0x4] sm:$0xf]
    %v1126 = vld [vmem:[#allocation9 + $0x8] sm:$0xf]
    %v1127 = vld [vmem:[#allocation9 + $0xc] sm:$0xf]
    %v1128 = vld [vmem:[#allocation2 + $0x8] sm:$0xff]
    %v1129 = vld [vmem:[#allocation2 + $0x10] sm:$0xff]
    %v1130 = vld [vmem:[#allocation2 + $0x28] sm:$0xff]
    %v1131 = vld [vmem:[#allocation2 + $0x30] sm:$0xff]
    %v1132 = vpack.c.bf16 %v1129, %v1128
    %v1133 = vpack.c.bf16 %v1131, %v1130
    %v1134 = vld [vmem:[%s362] sm:$0xf]
    %v1135 = vld [vmem:[%s362 + $0x4] sm:$0xf]
    %v1136 = vld [vmem:[%s362 + $0x8] sm:$0xf]
    %v1137 = vld [vmem:[%s362 + $0xc] sm:$0xf]
    %v1142 = vunpack.c.l.b16 %v1134
    %v1143 = vunpack.c.l.b16 %v1135
    %v1144 = vunpack.c.l.b16 %v1136
    %v1145 = vunpack.c.l.b16 %v1137
    %v1146 = vpack.c.b16 %v1143, %v1142
    %v1147 = vpack.c.b16 %v1145, %v1144
    %v1151 = vsel %vm72, %v1132, 0
    %v1154 = vsel %vm72, %v1133, 0
    %1156 = vmatprep.subr.bf16.mxu0 0
    %1157 = vmatpush1.bf16.msra.mxu0 %v1146
    %1158 = vmatprep.subr.bf16.mxu0 0
    %1159 = vmatpush1.bf16.msra.mxu0 %v1147
    %1160 = vmatprep.subr.bf16.mxu0 0
    %1161 = vmatpush1.bf16.msra.mxu0 0
    %1162 = vmatprep.subr.bf16.mxu0 0
    %1163 = vmatpush1.bf16.msra.mxu0 0
    %1164 = vmatprep.subr.bf16.mxu0 0
    %1165 = vmatpush1.bf16.msra.mxu0 0
    %1166 = vmatprep.subr.bf16.mxu0 0
    %1167 = vmatpush1.bf16.msra.mxu0 0
    %1168 = vmatprep.subr.bf16.mxu0 0
    %1169 = vmatpush1.bf16.msra.mxu0 0
    %1170 = vmatprep.subr.bf16.mxu0 0
    %1171 = vmatpush1.bf16.msra.mxu0 0
    %1172 = vmatprep.subr.bf16.mxu0 0
    %1173 = vmatpush1.bf16.msra.mxu0 0
    %1174 = vmatprep.subr.bf16.mxu0 0
    %1175 = vmatpush1.bf16.msra.mxu0 0
    %1176 = vmatprep.subr.bf16.mxu0 0
    %1177 = vmatpush1.bf16.msra.mxu0 0
    %1178 = vmatprep.subr.bf16.mxu0 0
    %1179 = vmatpush1.bf16.msra.mxu0 0
    %1180 = vmatprep.subr.bf16.mxu0 0
    %1181 = vmatpush1.bf16.msra.mxu0 0
    %1182 = vmatprep.subr.bf16.mxu0 0
    %1183 = vmatpush1.bf16.msra.mxu0 0
    %1184 = vmatprep.subr.bf16.mxu0 0
    %1185 = vmatpush1.bf16.msra.mxu0 0
    %1186 = vmatprep.subr.bf16.mxu0 0
    %1187 = vmatpush1.bf16.msra.mxu0 0
    %1188 = vmatprep.mubr.bf16.mxu0 0
    %1189 = vmatmul.mubr.bf16.gmra.mrb[0].mxu0 %v1151
    %v1190 = vpop.f32.mrb[0].mxu0
    %v1191 = vadd.f32 0.0, %v1190
    %v1192 = vpop.f32.mrb[0].mxu0
    %v1193 = vpop.f32.mrb[0].mxu0
    %v1194 = vadd.f32 0.0, %v1193
    %v1195 = vpop.f32.mrb[0].mxu0
    %1196 = vmatprep.mubr.bf16.mxu0 0
    %1197 = vmatmul.mubr.bf16.gmra.mrb[0].mxu0 %v1154
    %v1198 = vpop.f32.mrb[0].mxu0
    %v1199 = vadd.f32 0.0, %v1198
    %v1200 = vpop.f32.mrb[0].mxu0
    %v1201 = vpop.f32.mrb[0].mxu0
    %v1202 = vadd.f32 0.0, %v1201
    %v1203 = vpop.f32.mrb[0].mxu0
    %1204 = vdwg.mxu0
    %v1209 = vunpack.c.l.b16 %v1124
    %v1210 = vunpack.c.l.b16 %v1125
    %v1211 = vunpack.c.l.b16 %v1126
    %v1212 = vunpack.c.l.b16 %v1127
    %v1213 = vpack.c.b16 %v1210, %v1209
    %v1214 = vpack.c.b16 %v1212, %v1211
    %v1218 = vsel %vm72, %v1122, 0
    %v1221 = vsel %vm72, %v1123, 0
    %1223 = vmatprep.subr.bf16.mxu0 0
    %1224 = vmatpush1.bf16.msra.mxu0 %v1213
    %1225 = vmatprep.subr.bf16.mxu0 0
    %1226 = vmatpush1.bf16.msra.mxu0 %v1214
    %1227 = vmatprep.subr.bf16.mxu0 0
    %1228 = vmatpush1.bf16.msra.mxu0 0
    %1229 = vmatprep.subr.bf16.mxu0 0
    %1230 = vmatpush1.bf16.msra.mxu0 0
    %1231 = vmatprep.subr.bf16.mxu0 0
    %1232 = vmatpush1.bf16.msra.mxu0 0
    %1233 = vmatprep.subr.bf16.mxu0 0
    %1234 = vmatpush1.bf16.msra.mxu0 0
    %1235 = vmatprep.subr.bf16.mxu0 0
    %1236 = vmatpush1.bf16.msra.mxu0 0
    %1237 = vmatprep.subr.bf16.mxu0 0
    %1238 = vmatpush1.bf16.msra.mxu0 0
    %1239 = vmatprep.subr.bf16.mxu0 0
    %1240 = vmatpush1.bf16.msra.mxu0 0
    %1241 = vmatprep.subr.bf16.mxu0 0
    %1242 = vmatpush1.bf16.msra.mxu0 0
    %1243 = vmatprep.subr.bf16.mxu0 0
    %1244 = vmatpush1.bf16.msra.mxu0 0
    %1245 = vmatprep.subr.bf16.mxu0 0
    %1246 = vmatpush1.bf16.msra.mxu0 0
    %1247 = vmatprep.subr.bf16.mxu0 0
    %1248 = vmatpush1.bf16.msra.mxu0 0
    %1249 = vmatprep.subr.bf16.mxu0 0
    %1250 = vmatpush1.bf16.msra.mxu0 0
    %1251 = vmatprep.subr.bf16.mxu0 0
    %1252 = vmatpush1.bf16.msra.mxu0 0
    %1253 = vmatprep.subr.bf16.mxu0 0
    %1254 = vmatpush1.bf16.msra.mxu0 0
    %1255 = vmatprep.mubr.bf16.mxu0 0
    %1256 = vmatmul.mubr.bf16.gmra.mrb[0].mxu0 %v1218
    %v1257 = vpop.f32.mrb[0].mxu0
    %v1258 = vadd.f32 %v1191, %v1257
    %v1259 = vpop.f32.mrb[0].mxu0
    %v1260 = vpop.f32.mrb[0].mxu0
    %v1261 = vadd.f32 %v1194, %v1260
    %v1262 = vpop.f32.mrb[0].mxu0
    %1263 = vmatprep.mubr.bf16.mxu0 0
    %1264 = vmatmul.mubr.bf16.gmra.mrb[0].mxu0 %v1221
    %v1265 = vpop.f32.mrb[0].mxu0
    %v1266 = vadd.f32 %v1199, %v1265
    %v1267 = vpop.f32.mrb[0].mxu0
    %v1268 = vpop.f32.mrb[0].mxu0
    %v1269 = vadd.f32 %v1202, %v1268
    %v1270 = vpop.f32.mrb[0].mxu0
    %1271 = vdwg.mxu0
    %v1272 = vld [vmem:[#allocation2 + $0x9] sm:$0xff]
    %v1273 = vld [vmem:[#allocation2 + $0x11] sm:$0xff]
    %v1274 = vld [vmem:[#allocation2 + $0x29] sm:$0xff]
    %v1275 = vld [vmem:[#allocation2 + $0x31] sm:$0xff]
    %v1276 = vpack.c.bf16 %v1273, %v1272
    %v1277 = vpack.c.bf16 %v1275, %v1274
    %v1278 = vld [vmem:[%s507] sm:$0xf]
    %v1279 = vld [vmem:[%s507 + $0x4] sm:$0xf]
    %v1280 = vld [vmem:[%s507 + $0x8] sm:$0xf]
    %v1281 = vld [vmem:[%s507 + $0xc] sm:$0xf]
    %v1286 = vunpack.c.l.b16 %v1278
    %v1287 = vunpack.c.l.b16 %v1279
    %v1288 = vunpack.c.l.b16 %v1280
    %v1289 = vunpack.c.l.b16 %v1281
    %v1290 = vpack.c.b16 %v1287, %v1286
    %v1291 = vpack.c.b16 %v1289, %v1288
    %v1295 = vsel %vm72, %v1276, 0
    %v1298 = vsel %vm72, %v1277, 0
    %1300 = vmatprep.subr.bf16.mxu0 0
    %1301 = vmatpush1.bf16.msra.mxu0 %v1290
    %1302 = vmatprep.subr.bf16.mxu0 0
    %1303 = vmatpush1.bf16.msra.mxu0 %v1291
    %1304 = vmatprep.subr.bf16.mxu0 0
    %1305 = vmatpush1.bf16.msra.mxu0 0
    %1306 = vmatprep.subr.bf16.mxu0 0
    %1307 = vmatpush1.bf16.msra.mxu0 0
    %1308 = vmatprep.subr.bf16.mxu0 0
    %1309 = vmatpush1.bf16.msra.mxu0 0
    %1310 = vmatprep.subr.bf16.mxu0 0
    %1311 = vmatpush1.bf16.msra.mxu0 0
    %1312 = vmatprep.subr.bf16.mxu0 0
    %1313 = vmatpush1.bf16.msra.mxu0 0
    %1314 = vmatprep.subr.bf16.mxu0 0
    %1315 = vmatpush1.bf16.msra.mxu0 0
    %1316 = vmatprep.subr.bf16.mxu0 0
    %1317 = vmatpush1.bf16.msra.mxu0 0
    %1318 = vmatprep.subr.bf16.mxu0 0
    %1319 = vmatpush1.bf16.msra.mxu0 0
    %1320 = vmatprep.subr.bf16.mxu0 0
    %1321 = vmatpush1.bf16.msra.mxu0 0
    %1322 = vmatprep.subr.bf16.mxu0 0
    %1323 = vmatpush1.bf16.msra.mxu0 0
    %1324 = vmatprep.subr.bf16.mxu0 0
    %1325 = vmatpush1.bf16.msra.mxu0 0
    %1326 = vmatprep.subr.bf16.mxu0 0
    %1327 = vmatpush1.bf16.msra.mxu0 0
    %1328 = vmatprep.subr.bf16.mxu0 0
    %1329 = vmatpush1.bf16.msra.mxu0 0
    %1330 = vmatprep.subr.bf16.mxu0 0
    %1331 = vmatpush1.bf16.msra.mxu0 0
    %1332 = vmatprep.mubr.bf16.mxu0 0
    %1333 = vmatmul.mubr.bf16.gmra.mrb[0].mxu0 %v1295
    %v1334 = vpop.f32.mrb[0].mxu0
    %v1335 = vadd.f32 0.0, %v1334
    %v1336 = vpop.f32.mrb[0].mxu0
    %v1337 = vpop.f32.mrb[0].mxu0
    %v1338 = vadd.f32 0.0, %v1337
    %v1339 = vpop.f32.mrb[0].mxu0
    %1340 = vmatprep.mubr.bf16.mxu0 0
    %1341 = vmatmul.mubr.bf16.gmra.mrb[0].mxu0 %v1298
    %v1342 = vpop.f32.mrb[0].mxu0
    %v1343 = vadd.f32 0.0, %v1342
    %v1344 = vpop.f32.mrb[0].mxu0
    %v1345 = vpop.f32.mrb[0].mxu0
    %v1346 = vadd.f32 0.0, %v1345
    %v1347 = vpop.f32.mrb[0].mxu0
    %1348 = vdwg.mxu0
    %v1349 = vadd.f32 %v1258, %v1335
    %v1350 = vadd.f32 %v1261, %v1338
    %v1351 = vadd.f32 %v1266, %v1343
    %v1352 = vadd.f32 %v1269, %v1346
    %v1354 = vlaneseq
    %v1355 = vshrl.u32 %v1354, 7
    %v1356 = vsub.s32 0, %v1355
    %v1357 = vrot.slane %v1117, %v1356
    %v1359 = vadd.f32 %v1349, %v1357
    %v1360 = vadd.f32 %v1350, %v1357
    %v1361 = vadd.f32 %v1351, %v1357
    %v1362 = vadd.f32 %v1352, %v1357
    %v1363 = vmax.f32 %v1359, 0.0
    %v1364 = vmax.f32 %v1360, 0.0
    %v1365 = vmax.f32 %v1361, 0.0
    %v1366 = vmax.f32 %v1362, 0.0
    %1367 = vst.msk [vmem:[#allocation3 + $0x8] sm:$0xff] %vm72, %v1363
    %1368 = vst.msk [vmem:[#allocation3 + $0x10] sm:$0xff] %vm72, %v1364
    %1369 = vst.msk [vmem:[#allocation3 + $0x28] sm:$0xff] %vm72, %v1365
    %1370 = vst.msk [vmem:[#allocation3 + $0x30] sm:$0xff] %vm72, %v1366
    %v1371 = vld [vmem:[%s601] sm:$0x1]
    %v1372 = vld [vmem:[#allocation3 + $0x6] sm:$0xff]
    %v1373 = vld [vmem:[#allocation3 + $0xe] sm:$0xff]
    %v1374 = vld [vmem:[#allocation3 + $0x26] sm:$0xff]
    %v1375 = vld [vmem:[#allocation3 + $0x2e] sm:$0xff]
    %v1376 = vpack.c.bf16 %v1373, %v1372
    %v1377 = vpack.c.bf16 %v1375, %v1374
    %v1378 = vld [vmem:[%s609] sm:$0xf]
    %v1379 = vld [vmem:[%s609 + $0x4] sm:$0xf]
    %v1380 = vld [vmem:[%s609 + $0x8] sm:$0xf]
    %v1381 = vld [vmem:[%s609 + $0xc] sm:$0xf]
    %v1382 = vld [vmem:[#allocation3 + $0x8] sm:$0xff]
    %v1383 = vld [vmem:[#allocation3 + $0x10] sm:$0xff]
    %v1384 = vld [vmem:[#allocation3 + $0x28] sm:$0xff]
    %v1385 = vld [vmem:[#allocation3 + $0x30] sm:$0xff]
    %v1386 = vpack.c.bf16 %v1383, %v1382
    %v1387 = vpack.c.bf16 %v1385, %v1384
    %v1388 = vld [vmem:[%s620] sm:$0xf]
    %v1389 = vld [vmem:[%s620 + $0x4] sm:$0xf]
    %v1390 = vld [vmem:[%s620 + $0x8] sm:$0xf]
    %v1391 = vld [vmem:[%s620 + $0xc] sm:$0xf]
    %v1396 = vunpack.c.l.b16 %v1388
    %v1397 = vunpack.c.l.b16 %v1389
    %v1398 = vunpack.c.l.b16 %v1390
    %v1399 = vunpack.c.l.b16 %v1391
    %v1400 = vpack.c.b16 %v1397, %v1396
    %v1401 = vpack.c.b16 %v1399, %v1398
    %v1405 = vsel %vm72, %v1386, 0
    %v1408 = vsel %vm72, %v1387, 0
    %1410 = vmatprep.subr.bf16.mxu0 0
    %1411 = vmatpush1.bf16.msra.mxu0 %v1400
    %1412 = vmatprep.subr.bf16.mxu0 0
    %1413 = vmatpush1.bf16.msra.mxu0 %v1401
    %1414 = vmatprep.subr.bf16.mxu0 0
    %1415 = vmatpush1.bf16.msra.mxu0 0
    %1416 = vmatprep.subr.bf16.mxu0 0
    %1417 = vmatpush1.bf16.msra.mxu0 0
    %1418 = vmatprep.subr.bf16.mxu0 0
    %1419 = vmatpush1.bf16.msra.mxu0 0
    %1420 = vmatprep.subr.bf16.mxu0 0
    %1421 = vmatpush1.bf16.msra.mxu0 0
    %1422 = vmatprep.subr.bf16.mxu0 0
    %1423 = vmatpush1.bf16.msra.mxu0 0
    %1424 = vmatprep.subr.bf16.mxu0 0
    %1425 = vmatpush1.bf16.msra.mxu0 0
    %1426 = vmatprep.subr.bf16.mxu0 0
    %1427 = vmatpush1.bf16.msra.mxu0 0
    %1428 = vmatprep.subr.bf16.mxu0 0
    %1429 = vmatpush1.bf16.msra.mxu0 0
    %1430 = vmatprep.subr.bf16.mxu0 0
    %1431 = vmatpush1.bf16.msra.mxu0 0
    %1432 = vmatprep.subr.bf16.mxu0 0
    %1433 = vmatpush1.bf16.msra.mxu0 0
    %1434 = vmatprep.subr.bf16.mxu0 0
    %1435 = vmatpush1.bf16.msra.mxu0 0
    %1436 = vmatprep.subr.bf16.mxu0 0
    %1437 = vmatpush1.bf16.msra.mxu0 0
    %1438 = vmatprep.subr.bf16.mxu0 0
    %1439 = vmatpush1.bf16.msra.mxu0 0
    %1440 = vmatprep.subr.bf16.mxu0 0
    %1441 = vmatpush1.bf16.msra.mxu0 0
    %1442 = vmatprep.mubr.bf16.mxu0 0
    %1443 = vmatmul.mubr.bf16.gmra.mrb[0].mxu0 %v1405
    %v1444 = vpop.f32.mrb[0].mxu0
    %v1445 = vadd.f32 0.0, %v1444
    %v1446 = vpop.f32.mrb[0].mxu0
    %v1447 = vpop.f32.mrb[0].mxu0
    %v1448 = vadd.f32 0.0, %v1447
    %v1449 = vpop.f32.mrb[0].mxu0
    %1450 = vmatprep.mubr.bf16.mxu0 0
    %1451 = vmatmul.mubr.bf16.gmra.mrb[0].mxu0 %v1408
    %v1452 = vpop.f32.mrb[0].mxu0
    %v1453 = vadd.f32 0.0, %v1452
    %v1454 = vpop.f32.mrb[0].mxu0
    %v1455 = vpop.f32.mrb[0].mxu0
    %v1456 = vadd.f32 0.0, %v1455
    %v1457 = vpop.f32.mrb[0].mxu0
    %1458 = vdwg.mxu0
    %v1463 = vunpack.c.l.b16 %v1378
    %v1464 = vunpack.c.l.b16 %v1379
    %v1465 = vunpack.c.l.b16 %v1380
    %v1466 = vunpack.c.l.b16 %v1381
    %v1467 = vpack.c.b16 %v1464, %v1463
    %v1468 = vpack.c.b16 %v1466, %v1465
    %v1472 = vsel %vm72, %v1376, 0
    %v1475 = vsel %vm72, %v1377, 0
    %1477 = vmatprep.subr.bf16.mxu0 0
    %1478 = vmatpush1.bf16.msra.mxu0 %v1467
    %1479 = vmatprep.subr.bf16.mxu0 0
    %1480 = vmatpush1.bf16.msra.mxu0 %v1468
    %1481 = vmatprep.subr.bf16.mxu0 0
    %1482 = vmatpush1.bf16.msra.mxu0 0
    %1483 = vmatprep.subr.bf16.mxu0 0
    %1484 = vmatpush1.bf16.msra.mxu0 0
    %1485 = vmatprep.subr.bf16.mxu0 0
    %1486 = vmatpush1.bf16.msra.mxu0 0
    %1487 = vmatprep.subr.bf16.mxu0 0
    %1488 = vmatpush1.bf16.msra.mxu0 0
    %1489 = vmatprep.subr.bf16.mxu0 0
    %1490 = vmatpush1.bf16.msra.mxu0 0
    %1491 = vmatprep.subr.bf16.mxu0 0
    %1492 = vmatpush1.bf16.msra.mxu0 0
    %1493 = vmatprep.subr.bf16.mxu0 0
    %1494 = vmatpush1.bf16.msra.mxu0 0
    %1495 = vmatprep.subr.bf16.mxu0 0
    %1496 = vmatpush1.bf16.msra.mxu0 0
    %1497 = vmatprep.subr.bf16.mxu0 0
    %1498 = vmatpush1.bf16.msra.mxu0 0
    %1499 = vmatprep.subr.bf16.mxu0 0
    %1500 = vmatpush1.bf16.msra.mxu0 0
    %1501 = vmatprep.subr.bf16.mxu0 0
    %1502 = vmatpush1.bf16.msra.mxu0 0
    %1503 = vmatprep.subr.bf16.mxu0 0
    %1504 = vmatpush1.bf16.msra.mxu0 0
    %1505 = vmatprep.subr.bf16.mxu0 0
    %1506 = vmatpush1.bf16.msra.mxu0 0
    %1507 = vmatprep.subr.bf16.mxu0 0
    %1508 = vmatpush1.bf16.msra.mxu0 0
    %1509 = vmatprep.mubr.bf16.mxu0 0
    %1510 = vmatmul.mubr.bf16.gmra.mrb[0].mxu0 %v1472
    %v1511 = vpop.f32.mrb[0].mxu0
    %v1512 = vadd.f32 %v1445, %v1511
    %v1513 = vpop.f32.mrb[0].mxu0
    %v1514 = vpop.f32.mrb[0].mxu0
    %v1515 = vadd.f32 %v1448, %v1514
    %v1516 = vpop.f32.mrb[0].mxu0
    %1517 = vmatprep.mubr.bf16.mxu0 0
    %1518 = vmatmul.mubr.bf16.gmra.mrb[0].mxu0 %v1475
    %v1519 = vpop.f32.mrb[0].mxu0
    %v1520 = vadd.f32 %v1453, %v1519
    %v1521 = vpop.f32.mrb[0].mxu0
    %v1522 = vpop.f32.mrb[0].mxu0
    %v1523 = vadd.f32 %v1456, %v1522
    %v1524 = vpop.f32.mrb[0].mxu0
    %1525 = vdwg.mxu0
    %v1526 = vld [vmem:[#allocation3 + $0xa] sm:$0xff]
    %v1527 = vld [vmem:[#allocation3 + $0x12] sm:$0xff]
    %v1528 = vld [vmem:[#allocation3 + $0x2a] sm:$0xff]
    %v1529 = vld [vmem:[#allocation3 + $0x32] sm:$0xff]
    %v1530 = vpack.c.bf16 %v1527, %v1526
    %v1531 = vpack.c.bf16 %v1529, %v1528
    %v1532 = vld [vmem:[%s765] sm:$0xf]
    %v1533 = vld [vmem:[%s765 + $0x4] sm:$0xf]
    %v1534 = vld [vmem:[%s765 + $0x8] sm:$0xf]
    %v1535 = vld [vmem:[%s765 + $0xc] sm:$0xf]
    %v1540 = vunpack.c.l.b16 %v1532
    %v1541 = vunpack.c.l.b16 %v1533
    %v1542 = vunpack.c.l.b16 %v1534
    %v1543 = vunpack.c.l.b16 %v1535
    %v1544 = vpack.c.b16 %v1541, %v1540
    %v1545 = vpack.c.b16 %v1543, %v1542
    %v1549 = vsel %vm72, %v1530, 0
    %v1552 = vsel %vm72, %v1531, 0
    %1554 = vmatprep.subr.bf16.mxu0 0
    %1555 = vmatpush1.bf16.msra.mxu0 %v1544
    %1556 = vmatprep.subr.bf16.mxu0 0
    %1557 = vmatpush1.bf16.msra.mxu0 %v1545
    %1558 = vmatprep.subr.bf16.mxu0 0
    %1559 = vmatpush1.bf16.msra.mxu0 0
    %1560 = vmatprep.subr.bf16.mxu0 0
    %1561 = vmatpush1.bf16.msra.mxu0 0
    %1562 = vmatprep.subr.bf16.mxu0 0
    %1563 = vmatpush1.bf16.msra.mxu0 0
    %1564 = vmatprep.subr.bf16.mxu0 0
    %1565 = vmatpush1.bf16.msra.mxu0 0
    %1566 = vmatprep.subr.bf16.mxu0 0
    %1567 = vmatpush1.bf16.msra.mxu0 0
    %1568 = vmatprep.subr.bf16.mxu0 0
    %1569 = vmatpush1.bf16.msra.mxu0 0
    %1570 = vmatprep.subr.bf16.mxu0 0
    %1571 = vmatpush1.bf16.msra.mxu0 0
    %1572 = vmatprep.subr.bf16.mxu0 0
    %1573 = vmatpush1.bf16.msra.mxu0 0
    %1574 = vmatprep.subr.bf16.mxu0 0
    %1575 = vmatpush1.bf16.msra.mxu0 0
    %1576 = vmatprep.subr.bf16.mxu0 0
    %1577 = vmatpush1.bf16.msra.mxu0 0
    %1578 = vmatprep.subr.bf16.mxu0 0
    %1579 = vmatpush1.bf16.msra.mxu0 0
    %1580 = vmatprep.subr.bf16.mxu0 0
    %1581 = vmatpush1.bf16.msra.mxu0 0
    %1582 = vmatprep.subr.bf16.mxu0 0
    %1583 = vmatpush1.bf16.msra.mxu0 0
    %1584 = vmatprep.subr.bf16.mxu0 0
    %1585 = vmatpush1.bf16.msra.mxu0 0
    %1586 = vmatprep.mubr.bf16.mxu0 0
    %1587 = vmatmul.mubr.bf16.gmra.mrb[0].mxu0 %v1549
    %v1588 = vpop.f32.mrb[0].mxu0
    %v1589 = vadd.f32 0.0, %v1588
    %v1590 = vpop.f32.mrb[0].mxu0
    %v1591 = vpop.f32.mrb[0].mxu0
    %v1592 = vadd.f32 0.0, %v1591
    %v1593 = vpop.f32.mrb[0].mxu0
    %1594 = vmatprep.mubr.bf16.mxu0 0
    %1595 = vmatmul.mubr.bf16.gmra.mrb[0].mxu0 %v1552
    %v1596 = vpop.f32.mrb[0].mxu0
    %v1597 = vadd.f32 0.0, %v1596
    %v1598 = vpop.f32.mrb[0].mxu0
    %v1599 = vpop.f32.mrb[0].mxu0
    %v1600 = vadd.f32 0.0, %v1599
    %v1601 = vpop.f32.mrb[0].mxu0
    %1602 = vdwg.mxu0
    %v1603 = vadd.f32 %v1512, %v1589
    %v1604 = vadd.f32 %v1515, %v1592
    %v1605 = vadd.f32 %v1520, %v1597
    %v1606 = vadd.f32 %v1523, %v1600
    %v1608 = vlaneseq
    %v1609 = vshrl.u32 %v1608, 7
    %v1610 = vsub.s32 0, %v1609
    %v1611 = vrot.slane %v1371, %v1610
    %v1613 = vadd.f32 %v1603, %v1611
    %v1614 = vadd.f32 %v1604, %v1611
    %v1615 = vadd.f32 %v1605, %v1611
    %v1616 = vadd.f32 %v1606, %v1611
    %v1617 = vmax.f32 %v1613, 0.0
    %v1618 = vmax.f32 %v1614, 0.0
    %v1619 = vmax.f32 %v1615, 0.0
    %v1620 = vmax.f32 %v1616, 0.0
    %1621 = vst.msk [vmem:[#allocation2 + $0x8] sm:$0xff] %vm72, %v1617
    %1622 = vst.msk [vmem:[#allocation2 + $0x10] sm:$0xff] %vm72, %v1618
    %1623 = vst.msk [vmem:[#allocation2 + $0x28] sm:$0xff] %vm72, %v1619
    %1624 = vst.msk [vmem:[#allocation2 + $0x30] sm:$0xff] %vm72, %v1620
    %v1625 = vld [vmem:[%s859] sm:$0x1]
    %v1626 = vld [vmem:[#allocation2 + $0x7] sm:$0xff]
    %v1627 = vld [vmem:[#allocation2 + $0xf] sm:$0xff]
    %v1628 = vld [vmem:[#allocation2 + $0x27] sm:$0xff]
    %v1629 = vld [vmem:[#allocation2 + $0x2f] sm:$0xff]
    %v1630 = vpack.c.bf16 %v1627, %v1626
    %v1631 = vpack.c.bf16 %v1629, %v1628
    %v1632 = vld [vmem:[%s867] sm:$0xf]
    %v1633 = vld [vmem:[%s867 + $0x4] sm:$0xf]
    %v1634 = vld [vmem:[%s867 + $0x8] sm:$0xf]
    %v1635 = vld [vmem:[%s867 + $0xc] sm:$0xf]
    %v1636 = vld [vmem:[#allocation2 + $0x8] sm:$0xff]
    %v1637 = vld [vmem:[#allocation2 + $0x10] sm:$0xff]
    %v1638 = vld [vmem:[#allocation2 + $0x28] sm:$0xff]
    %v1639 = vld [vmem:[#allocation2 + $0x30] sm:$0xff]
    %v1640 = vpack.c.bf16 %v1637, %v1636
    %v1641 = vpack.c.bf16 %v1639, %v1638
    %v1642 = vld [vmem:[%s878] sm:$0xf]
    %v1643 = vld [vmem:[%s878 + $0x4] sm:$0xf]
    %v1644 = vld [vmem:[%s878 + $0x8] sm:$0xf]
    %v1645 = vld [vmem:[%s878 + $0xc] sm:$0xf]
    %v1650 = vunpack.c.l.b16 %v1642
    %v1651 = vunpack.c.l.b16 %v1643
    %v1652 = vunpack.c.l.b16 %v1644
    %v1653 = vunpack.c.l.b16 %v1645
    %v1654 = vpack.c.b16 %v1651, %v1650
    %v1655 = vpack.c.b16 %v1653, %v1652
    %v1659 = vsel %vm72, %v1640, 0
    %v1662 = vsel %vm72, %v1641, 0
    %1664 = vmatprep.subr.bf16.mxu0 0
    %1665 = vmatpush1.bf16.msra.mxu0 %v1654
    %1666 = vmatprep.subr.bf16.mxu0 0
    %1667 = vmatpush1.bf16.msra.mxu0 %v1655
    %1668 = vmatprep.subr.bf16.mxu0 0
    %1669 = vmatpush1.bf16.msra.mxu0 0
    %1670 = vmatprep.subr.bf16.mxu0 0
    %1671 = vmatpush1.bf16.msra.mxu0 0
    %1672 = vmatprep.subr.bf16.mxu0 0
    %1673 = vmatpush1.bf16.msra.mxu0 0
    %1674 = vmatprep.subr.bf16.mxu0 0
    %1675 = vmatpush1.bf16.msra.mxu0 0
    %1676 = vmatprep.subr.bf16.mxu0 0
    %1677 = vmatpush1.bf16.msra.mxu0 0
    %1678 = vmatprep.subr.bf16.mxu0 0
    %1679 = vmatpush1.bf16.msra.mxu0 0
    %1680 = vmatprep.subr.bf16.mxu0 0
    %1681 = vmatpush1.bf16.msra.mxu0 0
    %1682 = vmatprep.subr.bf16.mxu0 0
    %1683 = vmatpush1.bf16.msra.mxu0 0
    %1684 = vmatprep.subr.bf16.mxu0 0
    %1685 = vmatpush1.bf16.msra.mxu0 0
    %1686 = vmatprep.subr.bf16.mxu0 0
    %1687 = vmatpush1.bf16.msra.mxu0 0
    %1688 = vmatprep.subr.bf16.mxu0 0
    %1689 = vmatpush1.bf16.msra.mxu0 0
    %1690 = vmatprep.subr.bf16.mxu0 0
    %1691 = vmatpush1.bf16.msra.mxu0 0
    %1692 = vmatprep.subr.bf16.mxu0 0
    %1693 = vmatpush1.bf16.msra.mxu0 0
    %1694 = vmatprep.subr.bf16.mxu0 0
    %1695 = vmatpush1.bf16.msra.mxu0 0
    %1696 = vmatprep.mubr.bf16.mxu0 0
    %1697 = vmatmul.mubr.bf16.gmra.mrb[0].mxu0 %v1659
    %v1698 = vpop.f32.mrb[0].mxu0
    %v1699 = vadd.f32 0.0, %v1698
    %v1700 = vpop.f32.mrb[0].mxu0
    %v1701 = vpop.f32.mrb[0].mxu0
    %v1702 = vadd.f32 0.0, %v1701
    %v1703 = vpop.f32.mrb[0].mxu0
    %1704 = vmatprep.mubr.bf16.mxu0 0
    %1705 = vmatmul.mubr.bf16.gmra.mrb[0].mxu0 %v1662
    %v1706 = vpop.f32.mrb[0].mxu0
    %v1707 = vadd.f32 0.0, %v1706
    %v1708 = vpop.f32.mrb[0].mxu0
    %v1709 = vpop.f32.mrb[0].mxu0
    %v1710 = vadd.f32 0.0, %v1709
    %v1711 = vpop.f32.mrb[0].mxu0
    %1712 = vdwg.mxu0
    %v1717 = vunpack.c.l.b16 %v1632
    %v1718 = vunpack.c.l.b16 %v1633
    %v1719 = vunpack.c.l.b16 %v1634
    %v1720 = vunpack.c.l.b16 %v1635
    %v1721 = vpack.c.b16 %v1718, %v1717
    %v1722 = vpack.c.b16 %v1720, %v1719
    %v1726 = vsel %vm72, %v1630, 0
    %v1729 = vsel %vm72, %v1631, 0
    %1731 = vmatprep.subr.bf16.mxu0 0
    %1732 = vmatpush1.bf16.msra.mxu0 %v1721
    %1733 = vmatprep.subr.bf16.mxu0 0
    %1734 = vmatpush1.bf16.msra.mxu0 %v1722
    %1735 = vmatprep.subr.bf16.mxu0 0
    %1736 = vmatpush1.bf16.msra.mxu0 0
    %1737 = vmatprep.subr.bf16.mxu0 0
    %1738 = vmatpush1.bf16.msra.mxu0 0
    %1739 = vmatprep.subr.bf16.mxu0 0
    %1740 = vmatpush1.bf16.msra.mxu0 0
    %1741 = vmatprep.subr.bf16.mxu0 0
    %1742 = vmatpush1.bf16.msra.mxu0 0
    %1743 = vmatprep.subr.bf16.mxu0 0
    %1744 = vmatpush1.bf16.msra.mxu0 0
    %1745 = vmatprep.subr.bf16.mxu0 0
    %1746 = vmatpush1.bf16.msra.mxu0 0
    %1747 = vmatprep.subr.bf16.mxu0 0
    %1748 = vmatpush1.bf16.msra.mxu0 0
    %1749 = vmatprep.subr.bf16.mxu0 0
    %1750 = vmatpush1.bf16.msra.mxu0 0
    %1751 = vmatprep.subr.bf16.mxu0 0
    %1752 = vmatpush1.bf16.msra.mxu0 0
    %1753 = vmatprep.subr.bf16.mxu0 0
    %1754 = vmatpush1.bf16.msra.mxu0 0
    %1755 = vmatprep.subr.bf16.mxu0 0
    %1756 = vmatpush1.bf16.msra.mxu0 0
    %1757 = vmatprep.subr.bf16.mxu0 0
    %1758 = vmatpush1.bf16.msra.mxu0 0
    %1759 = vmatprep.subr.bf16.mxu0 0
    %1760 = vmatpush1.bf16.msra.mxu0 0
    %1761 = vmatprep.subr.bf16.mxu0 0
    %1762 = vmatpush1.bf16.msra.mxu0 0
    %1763 = vmatprep.mubr.bf16.mxu0 0
    %1764 = vmatmul.mubr.bf16.gmra.mrb[0].mxu0 %v1726
    %v1765 = vpop.f32.mrb[0].mxu0
    %v1766 = vadd.f32 %v1699, %v1765
    %v1767 = vpop.f32.mrb[0].mxu0
    %v1768 = vpop.f32.mrb[0].mxu0
    %v1769 = vadd.f32 %v1702, %v1768
    %v1770 = vpop.f32.mrb[0].mxu0
    %1771 = vmatprep.mubr.bf16.mxu0 0
    %1772 = vmatmul.mubr.bf16.gmra.mrb[0].mxu0 %v1729
    %v1773 = vpop.f32.mrb[0].mxu0
    %v1774 = vadd.f32 %v1707, %v1773
    %v1775 = vpop.f32.mrb[0].mxu0
    %v1776 = vpop.f32.mrb[0].mxu0
    %v1777 = vadd.f32 %v1710, %v1776
    %v1778 = vpop.f32.mrb[0].mxu0
    %1779 = vdwg.mxu0
    %v1780 = vld [vmem:[#allocation2 + $0x9] sm:$0xff]
    %v1781 = vld [vmem:[#allocation2 + $0x11] sm:$0xff]
    %v1782 = vld [vmem:[#allocation2 + $0x29] sm:$0xff]
    %v1783 = vld [vmem:[#allocation2 + $0x31] sm:$0xff]
    %v1784 = vpack.c.bf16 %v1781, %v1780
    %v1785 = vpack.c.bf16 %v1783, %v1782
    %v1786 = vld [vmem:[%s1023] sm:$0xf]
    %v1787 = vld [vmem:[%s1023 + $0x4] sm:$0xf]
    %v1788 = vld [vmem:[%s1023 + $0x8] sm:$0xf]
    %v1789 = vld [vmem:[%s1023 + $0xc] sm:$0xf]
    %v1794 = vunpack.c.l.b16 %v1786
    %v1795 = vunpack.c.l.b16 %v1787
    %v1796 = vunpack.c.l.b16 %v1788
    %v1797 = vunpack.c.l.b16 %v1789
    %v1798 = vpack.c.b16 %v1795, %v1794
    %v1799 = vpack.c.b16 %v1797, %v1796
    %v1803 = vsel %vm72, %v1784, 0
    %v1806 = vsel %vm72, %v1785, 0
    %1808 = vmatprep.subr.bf16.mxu0 0
    %1809 = vmatpush1.bf16.msra.mxu0 %v1798
    %1810 = vmatprep.subr.bf16.mxu0 0
    %1811 = vmatpush1.bf16.msra.mxu0 %v1799
    %1812 = vmatprep.subr.bf16.mxu0 0
    %1813 = vmatpush1.bf16.msra.mxu0 0
    %1814 = vmatprep.subr.bf16.mxu0 0
    %1815 = vmatpush1.bf16.msra.mxu0 0
    %1816 = vmatprep.subr.bf16.mxu0 0
    %1817 = vmatpush1.bf16.msra.mxu0 0
    %1818 = vmatprep.subr.bf16.mxu0 0
    %1819 = vmatpush1.bf16.msra.mxu0 0
    %1820 = vmatprep.subr.bf16.mxu0 0
    %1821 = vmatpush1.bf16.msra.mxu0 0
    %1822 = vmatprep.subr.bf16.mxu0 0
    %1823 = vmatpush1.bf16.msra.mxu0 0
    %1824 = vmatprep.subr.bf16.mxu0 0
    %1825 = vmatpush1.bf16.msra.mxu0 0
    %1826 = vmatprep.subr.bf16.mxu0 0
    %1827 = vmatpush1.bf16.msra.mxu0 0
    %1828 = vmatprep.subr.bf16.mxu0 0
    %1829 = vmatpush1.bf16.msra.mxu0 0
    %1830 = vmatprep.subr.bf16.mxu0 0
    %1831 = vmatpush1.bf16.msra.mxu0 0
    %1832 = vmatprep.subr.bf16.mxu0 0
    %1833 = vmatpush1.bf16.msra.mxu0 0
    %1834 = vmatprep.subr.bf16.mxu0 0
    %1835 = vmatpush1.bf16.msra.mxu0 0
    %1836 = vmatprep.subr.bf16.mxu0 0
    %1837 = vmatpush1.bf16.msra.mxu0 0
    %1838 = vmatprep.subr.bf16.mxu0 0
    %1839 = vmatpush1.bf16.msra.mxu0 0
    %1840 = vmatprep.mubr.bf16.mxu0 0
    %1841 = vmatmul.mubr.bf16.gmra.mrb[0].mxu0 %v1803
    %v1842 = vpop.f32.mrb[0].mxu0
    %v1843 = vadd.f32 0.0, %v1842
    %v1844 = vpop.f32.mrb[0].mxu0
    %v1845 = vpop.f32.mrb[0].mxu0
    %v1846 = vadd.f32 0.0, %v1845
    %v1847 = vpop.f32.mrb[0].mxu0
    %1848 = vmatprep.mubr.bf16.mxu0 0
    %1849 = vmatmul.mubr.bf16.gmra.mrb[0].mxu0 %v1806
    %v1850 = vpop.f32.mrb[0].mxu0
    %v1851 = vadd.f32 0.0, %v1850
    %v1852 = vpop.f32.mrb[0].mxu0
    %v1853 = vpop.f32.mrb[0].mxu0
    %v1854 = vadd.f32 0.0, %v1853
    %v1855 = vpop.f32.mrb[0].mxu0
    %1856 = vdwg.mxu0
    %v1857 = vadd.f32 %v1766, %v1843
    %v1858 = vadd.f32 %v1769, %v1846
    %v1859 = vadd.f32 %v1774, %v1851
    %v1860 = vadd.f32 %v1777, %v1854
    %v1862 = vlaneseq
    %v1863 = vshrl.u32 %v1862, 7
    %v1864 = vsub.s32 0, %v1863
    %v1865 = vrot.slane %v1625, %v1864
    %v1867 = vadd.f32 %v1857, %v1865
    %v1868 = vadd.f32 %v1858, %v1865
    %v1869 = vadd.f32 %v1859, %v1865
    %v1870 = vadd.f32 %v1860, %v1865
    %v1871 = vmax.f32 %v1867, 0.0
    %v1872 = vmax.f32 %v1868, 0.0
    %v1873 = vmax.f32 %v1869, 0.0
    %v1874 = vmax.f32 %v1870, 0.0
    %1875 = vst.msk [vmem:[#allocation3 + $0x8] sm:$0xff] %vm72, %v1871
    %1876 = vst.msk [vmem:[#allocation3 + $0x10] sm:$0xff] %vm72, %v1872
    %1877 = vst.msk [vmem:[#allocation3 + $0x28] sm:$0xff] %vm72, %v1873
    %1878 = vst.msk [vmem:[#allocation3 + $0x30] sm:$0xff] %vm72, %v1874
    %v1879 = vld [vmem:[#allocation3 + $0x8] sm:$0xff]
    %v1880 = vld [vmem:[#allocation3 + $0x10] sm:$0xff]
    %v1881 = vld [vmem:[#allocation3 + $0x28] sm:$0xff]
    %v1882 = vld [vmem:[#allocation3 + $0x30] sm:$0xff]
    %v1883 = vpack.c.bf16 %v1880, %v1879
    %v1884 = vpack.c.bf16 %v1882, %v1881
    %v1885 = vld [vmem:[%s6] sm:$0xf]
    %v1886 = vld [vmem:[%s6 + $0x4] sm:$0xf]
    %v1887 = vld [vmem:[%s6 + $0x8] sm:$0xf]
    %v1888 = vld [vmem:[%s6 + $0xc] sm:$0xf]
    %v1889 = vld [vmem:[%s7] sm:$0x1]
    %v1891 = vlaneseq
    %v1892 = vshrl.u32 %v1891, 7
    %v1893 = vsub.s32 0, %v1892
    %v1894 = vrot.slane %v1889, %v1893
    %v1900 = vunpack.c.l.b16 %v1885
    %v1901 = vunpack.c.l.b16 %v1886
    %v1902 = vunpack.c.l.b16 %v1887
    %v1903 = vunpack.c.l.b16 %v1888
    %v1904 = vpack.c.b16 %v1901, %v1900
    %v1905 = vpack.c.b16 %v1903, %v1902
    %v1909 = vsel %vm72, %v1883, 0
    %v1912 = vsel %vm72, %v1884, 0
    %1914 = vmatprep.subr.bf16.mxu0 0
    %1915 = vmatpush1.bf16.msra.mxu0 %v1904
    %1916 = vmatprep.subr.bf16.mxu0 0
    %1917 = vmatpush1.bf16.msra.mxu0 %v1905
    %1918 = vmatprep.subr.bf16.mxu0 0
    %1919 = vmatpush1.bf16.msra.mxu0 0
    %1920 = vmatprep.subr.bf16.mxu0 0
    %1921 = vmatpush1.bf16.msra.mxu0 0
    %1922 = vmatprep.subr.bf16.mxu0 0
    %1923 = vmatpush1.bf16.msra.mxu0 0
    %1924 = vmatprep.subr.bf16.mxu0 0
    %1925 = vmatpush1.bf16.msra.mxu0 0
    %1926 = vmatprep.subr.bf16.mxu0 0
    %1927 = vmatpush1.bf16.msra.mxu0 0
    %1928 = vmatprep.subr.bf16.mxu0 0
    %1929 = vmatpush1.bf16.msra.mxu0 0
    %1930 = vmatprep.subr.bf16.mxu0 0
    %1931 = vmatpush1.bf16.msra.mxu0 0
    %1932 = vmatprep.subr.bf16.mxu0 0
    %1933 = vmatpush1.bf16.msra.mxu0 0
    %1934 = vmatprep.subr.bf16.mxu0 0
    %1935 = vmatpush1.bf16.msra.mxu0 0
    %1936 = vmatprep.subr.bf16.mxu0 0
    %1937 = vmatpush1.bf16.msra.mxu0 0
    %1938 = vmatprep.subr.bf16.mxu0 0
    %1939 = vmatpush1.bf16.msra.mxu0 0
    %1940 = vmatprep.subr.bf16.mxu0 0
    %1941 = vmatpush1.bf16.msra.mxu0 0
    %1942 = vmatprep.subr.bf16.mxu0 0
    %1943 = vmatpush1.bf16.msra.mxu0 0
    %1944 = vmatprep.subr.bf16.mxu0 0
    %1945 = vmatpush1.bf16.msra.mxu0 0
    %1946 = vmatprep.mubr.bf16.mxu0 0
    %1947 = vmatmul.mubr.bf16.gmra.mrb[0].mxu0 %v1909
    %v1948 = vpop.f32.mrb[0].mxu0
    %v1949 = vadd.f32 %v1894, %v1948
    %v1950 = vpop.f32.mrb[0].mxu0
    %v1951 = vpop.f32.mrb[0].mxu0
    %v1952 = vadd.f32 %v1894, %v1951
    %v1953 = vpop.f32.mrb[0].mxu0
    %1954 = vmatprep.mubr.bf16.mxu0 0
    %1955 = vmatmul.mubr.bf16.gmra.mrb[0].mxu0 %v1912
    %v1956 = vpop.f32.mrb[0].mxu0
    %v1957 = vadd.f32 %v1894, %v1956
    %v1958 = vpop.f32.mrb[0].mxu0
    %v1959 = vpop.f32.mrb[0].mxu0
    %v1960 = vadd.f32 %v1894, %v1959
    %v1961 = vpop.f32.mrb[0].mxu0
    %1962 = vdwg.mxu0
    %v1963 = vlaneseq
    %v1964 = vand.u32 %v1963, 127
    %vm1965 = vcmask 64512
    %v1966 = vsel %vm1965, %v1949, -inf
    %1967 = vmax.xlane.f32.xlu0 %v1966
    %v1968 = vpop.xlane.xlu0 %1967
    %v1969 = vsel %vm1965, %v1952, -inf
    %1970 = vmax.xlane.f32.xlu0 %v1969
    %v1971 = vpop.xlane.xlu0 %1970
    %v1972 = vsel %vm1965, %v1957, -inf
    %1973 = vmax.xlane.f32.xlu0 %v1972
    %v1974 = vpop.xlane.xlu0 %1973
    %v1975 = vsel %vm1965, %v1960, -inf
    %1976 = vmax.xlane.f32.xlu0 %v1975
    %v1977 = vpop.xlane.xlu0 %1976
    %vm1978 = vcmp.eq.f32.partialorder %v1949, %v1968
    %vm1979 = vcmp.eq.f32.partialorder %v1952, %v1971
    %vm1980 = vcmp.eq.f32.partialorder %v1957, %v1974
    %vm1981 = vcmp.eq.f32.partialorder %v1960, %v1977
    %v1982 = vsel %vm1978, %v1964, 8
    %v1983 = vsel %vm1979, %v1964, 8
    %v1984 = vsel %vm1980, %v1964, 8
    %v1985 = vsel %vm1981, %v1964, 8
    %v1986 = vsel %vm1965, %v1982, 2147483647
    %v1987 = vand.u32 %v1986, 65535
    %v1988 = vshra.s32 %v1986, 16
    %v1989 = vcvt.s32.f32 %v1987
    %v1990 = vcvt.s32.f32 %v1988
    %1991 = vmin.xlane.f32.xlu0 %v1990
    %v1992 = vpop.xlane.xlu0 %1991
    %vm1993 = vcmp.eq.f32.partialorder %v1990, %v1992
    %v1994 = vsel %vm1993, %v1989, inf
    %1995 = vmin.xlane.f32.xlu0 %v1994
    %v1996 = vpop.xlane.xlu0 %1995
    %v1997 = vcvt.f32.s32 %v1996
    %v1998 = vcvt.f32.s32 %v1992
    %v1999 = vshll.u32 %v1998, 16
    %v2000 = vadd.s32 %v1999, %v1997
    %v2001 = vsel %vm1965, %v1983, 2147483647
    %v2002 = vand.u32 %v2001, 65535
    %v2003 = vshra.s32 %v2001, 16
    %v2004 = vcvt.s32.f32 %v2002
    %v2005 = vcvt.s32.f32 %v2003
    %2006 = vmin.xlane.f32.xlu0 %v2005
    %v2007 = vpop.xlane.xlu0 %2006
    %vm2008 = vcmp.eq.f32.partialorder %v2005, %v2007
    %v2009 = vsel %vm2008, %v2004, inf
    %2010 = vmin.xlane.f32.xlu0 %v2009
    %v2011 = vpop.xlane.xlu0 %2010
    %v2012 = vcvt.f32.s32 %v2011
    %v2013 = vcvt.f32.s32 %v2007
    %v2014 = vshll.u32 %v2013, 16
    %v2015 = vadd.s32 %v2014, %v2012
    %v2016 = vsel %vm1965, %v1984, 2147483647
    %v2017 = vand.u32 %v2016, 65535
    %v2018 = vshra.s32 %v2016, 16
    %v2019 = vcvt.s32.f32 %v2017
    %v2020 = vcvt.s32.f32 %v2018
    %2021 = vmin.xlane.f32.xlu0 %v2020
    %v2022 = vpop.xlane.xlu0 %2021
    %vm2023 = vcmp.eq.f32.partialorder %v2020, %v2022
    %v2024 = vsel %vm2023, %v2019, inf
    %2025 = vmin.xlane.f32.xlu0 %v2024
    %v2026 = vpop.xlane.xlu0 %2025
    %v2027 = vcvt.f32.s32 %v2026
    %v2028 = vcvt.f32.s32 %v2022
    %v2029 = vshll.u32 %v2028, 16
    %v2030 = vadd.s32 %v2029, %v2027
    %v2031 = vsel %vm1965, %v1985, 2147483647
    %v2032 = vand.u32 %v2031, 65535
    %v2033 = vshra.s32 %v2031, 16
    %v2034 = vcvt.s32.f32 %v2032
    %v2035 = vcvt.s32.f32 %v2033
    %2036 = vmin.xlane.f32.xlu0 %v2035
    %v2037 = vpop.xlane.xlu0 %2036
    %vm2038 = vcmp.eq.f32.partialorder %v2035, %v2037
    %v2039 = vsel %vm2038, %v2034, inf
    %2040 = vmin.xlane.f32.xlu0 %v2039
    %v2041 = vpop.xlane.xlu0 %2040
    %v2042 = vcvt.f32.s32 %v2041
    %v2043 = vcvt.f32.s32 %v2037
    %v2044 = vshll.u32 %v2043, 16
    %v2045 = vadd.s32 %v2044, %v2042
    %v2046 = vld [vmem:[%s1] sm:$0x3]
    %2047 = vset.pattern.permute.xlu0 0
    %2048 = vperm.xlu0 %2047, %v2046
    %v2049 = vpop.permute.xlu0 %2048
    %vm2050 = vcmp.lt.s32.totalorder %v1964, %v2049
    %v2051 = vlaneseq
    %v2052 = vshrl.u32 %v2051, 7
    %v2053 = vsub.s32 %v1964, %v2052
    %v2054 = vrot.slane %v2000, %v2053
    %v2055 = vadd.s32 %v1964, 4294967288
    %v2056 = vlaneseq
    %v2057 = vshrl.u32 %v2056, 7
    %v2058 = vsub.s32 %v2055, %v2057
    %v2059 = vrot.slane %v2015, %v2058
    %vm2060 = vcmask 130112
    %v2061 = vsel %vm2060, %v2059, %v2054
    %v2062 = vlaneseq
    %v2063 = vshrl.u32 %v2062, 7
    %v2064 = vsub.s32 %v1964, %v2063
    %v2065 = vrot.slane %v2030, %v2064
    %v2066 = vlaneseq
    %v2067 = vshrl.u32 %v2066, 7
    %v2068 = vsub.s32 %v2055, %v2067
    %v2069 = vrot.slane %v2045, %v2068
    %v2070 = vsel %vm2060, %v2069, %v2065
    %vm2071 = vcmask 1041409
    %v2072 = vsel %vm2071, %v2070, %v2061
    %v2073 = vsel %vm2050, %v2072, 0
    %vm2074 = vcmask 123904
    %2075 = vst.msk [vmem:[#allocation10] sm:$0x3] %vm2074, %v2073
    // Predicated region
    $region46: #{tpu_custom_call.1} parent=1 // pred_check
      _
    $region47: #{tpu_custom_call.1} parent=1 // pred_check_branch
      %2077 = sbr.rel (0) target = $region49
    $region48: #{tpu_custom_call.1} parent=1 // pred_region
      %s2079 = ssub.s32 32, 32
      %2080 = vsyncadd [#allocation6], %s2079
      %s2082 = sshll.u32 [#allocation10], 4
      %s2083 = int_to_ptr.vmem [resolvable:$true] %s2082
      %2085 = dma.vmem_to_hbm [thread:$0]  %s2083, 32, %s8, [#allocation6]
    $region49: #{tpu_custom_call.1} parent=1 // pred_fallthru
      _
    // Predicated region
    $region50: #{tpu_custom_call.1} parent=1 // pred_check
      _
    $region51: #{tpu_custom_call.1} parent=1 // pred_check_branch
      %2087 = sbr.rel (0) target = $region53
    $region52: #{tpu_custom_call.1} parent=1 // pred_region
      %2088 = dma.done [#allocation6], 32
    $region53: #{tpu_custom_call.1} parent=1 // pred_fallthru
      _
    %2089 = vsyncpa [#allocation5], 1
    %2090 = vsyncpa [#allocation8], 1
    %2091 = vsyncpa [#allocation6], 1

</llo_original>
